<compile_context>
chip_gen: v7x
topology: tpu7x:2x2x1
jax: 0.10.0
libtpu: 0.0.40
codegen_flags: <defaults>
</compile_context>

<pallas_src>
import jax
import jax.numpy as jnp
from jax import lax
from jax.experimental import pallas as pl
from jax.experimental.pallas import tpu as pltpu


# ---------------------------------------------------------------------------
# Kernel
# ---------------------------------------------------------------------------
def _head_kernel(hs_ref,            # (Bt, 3, S, H)      bf16
                 w0_ref, b0_ref,    # (3, H, 256) bf16,  (1, 256) f32   (w0 / 3)
                 w1_ref, b1_ref,    # (3, 256, 128) bf16, (1, 128) f32
                 w2_ref, b2_ref,    # (3, 128, 2) bf16,  (1, 2) f32     (conv2*fc2*fc3 folded)
                 out_ref):          # (Bt, S, 2) f32
    Bt, _, S, H = hs_ref.shape
    M = Bt * S

    # mean of the last three hidden states: the 1/3 is folded into w0, so only
    # a 3-way add (f32 VPU) remains.  Dropout -> identity (eval mode).
    hs = hs_ref[...]
    x = (hs[:, 0].astype(jnp.float32)
         + hs[:, 1].astype(jnp.float32)
         + hs[:, 2].astype(jnp.float32))                     # (Bt, S, H) f32
    x = x.reshape(M, H).astype(jnp.bfloat16)                 # bf16 MXU feed

    # Rows at sequence boundaries (s == 0 / s == S-1) — these are exactly the
    # rows whose rolled contributions must be zeroed (also covers wrap-around
    # between the Bt sequences packed into this block).
    row = lax.broadcasted_iota(jnp.int32, (M, 1), 0)
    s_in_seq = row % S
    not_first = s_in_seq != 0
    not_last = s_in_seq != (S - 1)

    def conv_same(xb, w_ref, b_ref):
        # y[m] = x[m-1] @ w[0] + x[m] @ w[1] + x[m+1] @ w[2] + b  (zero pad at
        # sequence edges).  Shift the narrow outputs, not the wide inputs.
        y_p = jnp.dot(xb, w_ref[0], preferred_element_type=jnp.float32)
        y_m = jnp.dot(xb, w_ref[1], preferred_element_type=jnp.float32)
        y_n = jnp.dot(xb, w_ref[2], preferred_element_type=jnp.float32)
        y_p = jnp.where(not_first, pltpu.roll(y_p, shift=1, axis=0), 0.0)
        y_n = jnp.where(not_last, pltpu.roll(y_n, shift=M - 1, axis=0), 0.0)  # roll by -1
        return y_p + y_m + y_n + b_ref[...]

    def lrelu(v):
        return jnp.where(v >= 0, v, 0.2 * v)

    y = lrelu(conv_same(x, w0_ref, b0_ref))                          # (M, 256) f32
    y = lrelu(conv_same(y.astype(jnp.bfloat16), w1_ref, b1_ref))     # (M, 128) f32
    y = conv_same(y.astype(jnp.bfloat16), w2_ref, b2_ref)            # (M, 2): conv2+fc2+fc3
    out_ref[...] = y.reshape(Bt, S, 2).astype(out_ref.dtype)


# ---------------------------------------------------------------------------
# Wrapper
# ---------------------------------------------------------------------------
def _fold_params(params):
    """Offline algebra: fold the 1/3 mean into conv0 and conv2@fc2@fc3 into one conv."""
    (w0, b0, w1, b1, w2, b2, fw2, fb2, fw3, fb3) = params
    w0p = (w0 * (1.0 / 3.0)).astype(jnp.bfloat16)                  # mean folded in
    w1p = w1.astype(jnp.bfloat16)
    fw23 = jnp.dot(fw2, fw3)                                        # (64, 2)
    w2f = jnp.einsum("kcd,df->kcf", w2, fw23).astype(jnp.bfloat16)  # (3, 128, 2)
    b2f = jnp.dot(b2, fw23) + jnp.dot(fb2, fw3) + fb3               # (1, 2) f32
    return w0p, b0, w1p, b1, w2f, b2f


def _choose_block_batch(B, S, target_m=512):
    """Largest Bt dividing B with Bt*S <= target_m, keeping >= 2 grid steps."""
    best = 1
    for bt in range(1, B + 1):
        if B % bt != 0:
            continue
        if bt * S > target_m:
            break
        if B > 1 and B // bt < 2:     # keep both v7x TensorCores busy
            continue
        best = bt
    return best


def _full_spec(a):
    nd = a.ndim
    return pl.BlockSpec(a.shape, lambda i: (0,) * nd)   # grid-invariant, fetched once


def tweet_head_pallas(hs3, params, block_batch=None):
    """hs3: (3, B, S, H) f32 == stack([hs[-1], hs[-2], hs[-3]]).
    Returns (start_logits, end_logits), each (B, S)."""
    three, B, S, H = hs3.shape
    assert three == 3
    w0p, b0, w1p, b1, w2f, b2f = _fold_params(params)

    # Contiguous per-batch HBM blocks + bf16 MXU feed.
    hs_b = jnp.transpose(hs3, (1, 0, 2, 3)).astype(jnp.bfloat16)   # (B, 3, S, H)

    Bt = block_batch if block_batch is not None else _choose_block_batch(B, S)
    assert B % Bt == 0

    out = pl.pallas_call(
        _head_kernel,
        out_shape=jax.ShapeDtypeStruct((B, S, 2), jnp.float32),
        grid=(B // Bt,),
        in_specs=[
            pl.BlockSpec((Bt, 3, S, H), lambda i: (i, 0, 0, 0)),
            _full_spec(w0p), _full_spec(b0),
            _full_spec(w1p), _full_spec(b1),
            _full_spec(w2f), _full_spec(b2f),
        ],
        out_specs=pl.BlockSpec((Bt, S, 2), lambda i: (i, 0, 0)),
        compiler_params=pltpu.CompilerParams(
            dimension_semantics=("parallel",),
            vmem_limit_bytes=48 * 1024 * 1024,
        ),
    )(hs_b, w0p, b0, w1p, b1, w2f, b2f)

    start_logits = out[..., 0]     # split(1, dim=-1) + squeeze(-1)
    end_logits = out[..., 1]
    return start_logits, end_logits


# ---------------------------------------------------------------------------
# Pure-JAX references (sanity checks)
# ---------------------------------------------------------------------------
def _lrelu(v):
    return jnp.where(v >= 0, v, 0.2 * v)


def _conv_ref(x, w, b, precision):
    # x: (B, S, Cin); w: (3, Cin, Cout); PyTorch Conv1d(k=3, padding=1) semantics.
    zero = jnp.zeros_like(x[:, :1, :])
    xp = jnp.concatenate([zero, x[:, :-1, :]], axis=1)
    xn = jnp.concatenate([x[:, 1:, :], zero], axis=1)
    return (jnp.einsum("bsc,cd->bsd", xp, w[0], precision=precision)
            + jnp.einsum("bsc,cd->bsd", x, w[1], precision=precision)
            + jnp.einsum("bsc,cd->bsd", xn, w[2], precision=precision) + b)


def _reference_matched(hs3, params):
    """Reference with the same folding + bf16 rounding as the kernel (tight check)."""
    hi = lax.Precision.HIGHEST
    w0p, b0, w1p, b1, w2f, b2f = _fold_params(params)
    w0p, w1p, w2f = (a.astype(jnp.float32) for a in (w0p, w1p, w2f))
    rb = lambda a: a.astype(jnp.bfloat16).astype(jnp.float32)
    x = jnp.sum(rb(hs3), axis=0)                       # (B, S, H); 1/3 folded into w0p
    y = _lrelu(_conv_ref(rb(x), w0p, b0, hi))
    y = _lrelu(_conv_ref(rb(y), w1p, b1, hi))
    y = _conv_ref(rb(y), w2f, b2f, hi)
    return y[..., 0], y[..., 1]


def _reference_f32(hs3, params):
    """Faithful f32, unfused reference of the original PyTorch head (loose check)."""
    hi = lax.Precision.HIGHEST
    (w0, b0, w1, b1, w2, b2, fw2, fb2, fw3, fb3) = params
    x = jnp.mean(hs3, axis=0)
    x = _lrelu(_conv_ref(x, w0, b0, hi))
    x = _lrelu(_conv_ref(x, w1, b1, hi))
    x = _conv_ref(x, w2, b2, hi)
    x = jnp.einsum("bsc,cd->bsd", x, fw2, precision=hi) + fb2
    x = jnp.einsum("bsc,cd->bsd", x, fw3, precision=hi) + fb3
    return x[..., 0], x[..., 1]


# ---------------------------------------------------------------------------
# Test harness
# ---------------------------------------------------------------------------
def _init_params(key, H):
    """PyTorch-like default inits (uniform +-1/sqrt(fan_in)).
    Conv weights stored as (3, Cin, Cout) == torch (Cout, Cin, 3) transposed;
    Linear weights stored as (in, out) == torch weight.T."""
    ks = jax.random.split(key, 10)

    def u(k, shape, fan_in):
        b = fan_in ** -0.5
        return jax.random.uniform(k, shape, jnp.float32, -b, b)

    w0 = u(ks[0], (3, H, 256), 3 * H);    b0 = u(ks[1], (1, 256), 3 * H)
    w1 = u(ks[2], (3, 256, 128), 3 * 256); b1 = u(ks[3], (1, 128), 3 * 256)
    w2 = u(ks[4], (3, 128, 64), 3 * 128);  b2 = u(ks[5], (1, 64), 3 * 128)
    fw2 = u(ks[6], (64, 32), 64);          fb2 = u(ks[7], (1, 32), 64)
    fw3 = u(ks[8], (32, 2), 32);           fb3 = u(ks[9], (1, 2), 32)
    return (w0, b0, w1, b1, w2, b2, fw2, fb2, fw3, fb3)


if __name__ == "__main__":
    B, S, H = 4, 16, 128     # small synthetic shapes (real RoBERTa: H=768, S~128-384)
    key = jax.random.PRNGKey(0)
    k_hs, k_p = jax.random.split(key)

    # Synthetic stand-in for hs[-1], hs[-2], hs[-3] from the RoBERTa backbone.
    hs3 = jax.random.normal(k_hs, (3, B, S, H), jnp.float32)
    params = _init_params(k_p, H)

    start_logits, end_logits = jax.jit(tweet_head_pallas)(hs3, params)
    jax.block_until_ready((start_logits, end_logits))
    assert start_logits.shape == (B, S) and end_logits.shape == (B, S)

    # 1) tight check vs a pure-JAX reference using the same fold + bf16 rounding
    ms, me = _reference_matched(hs3, params)
    assert jnp.allclose(start_logits, ms, rtol=5e-2, atol=5e-3), \
        float(jnp.max(jnp.abs(start_logits - ms)))
    assert jnp.allclose(end_logits, me, rtol=5e-2, atol=5e-3), \
        float(jnp.max(jnp.abs(end_logits - me)))

    # 2) loose check vs the faithful f32 (unfused) reference of the PyTorch head
    fs, fe = _reference_f32(hs3, params)
    assert float(jnp.max(jnp.abs(start_logits - fs))) < 5e-2
    assert float(jnp.max(jnp.abs(end_logits - fe))) < 5e-2

    print("KERNEL_OK")
</pallas_src>

<mosaic_0001>
module attributes {stable_mosaic.version = 11 : i64} {
  func.func @_head_kernel(%arg0: i32, %arg1: memref<2x3x16x128xbf16, #tpu.memory_space<vmem>>, %arg2: memref<3x128x256xbf16, #tpu.memory_space<vmem>>, %arg3: memref<1x256xf32, #tpu.memory_space<vmem>>, %arg4: memref<3x256x128xbf16, #tpu.memory_space<vmem>>, %arg5: memref<1x128xf32, #tpu.memory_space<vmem>>, %arg6: memref<3x128x2xbf16, #tpu.memory_space<vmem>>, %arg7: memref<1x2xf32, #tpu.memory_space<vmem>>, %arg8: memref<2x16x2xf32, #tpu.memory_space<vmem>>) attributes {dimension_semantics = [#tpu.dimension_semantics<parallel>], iteration_bounds = array<i64: 2>, scalar_prefetch = 0 : i64, scratch_operands = 0 : i64, tpu.core_type = #tpu.core_type<tc>, window_params = [{transform_indices = @transform_0, window_bounds = array<i64: 2, 3, 16, 128>}, {pipeline_mode = #tpu.pipeline_mode<synchronous>, transform_indices = @transform_1, window_bounds = array<i64: 3, 128, 256>}, {pipeline_mode = #tpu.pipeline_mode<synchronous>, transform_indices = @transform_2, window_bounds = array<i64: 1, 256>}, {pipeline_mode = #tpu.pipeline_mode<synchronous>, transform_indices = @transform_3, window_bounds = array<i64: 3, 256, 128>}, {pipeline_mode = #tpu.pipeline_mode<synchronous>, transform_indices = @transform_4, window_bounds = array<i64: 1, 128>}, {pipeline_mode = #tpu.pipeline_mode<synchronous>, transform_indices = @transform_5, window_bounds = array<i64: 3, 128, 2>}, {pipeline_mode = #tpu.pipeline_mode<synchronous>, transform_indices = @transform_6, window_bounds = array<i64: 1, 2>}, {transform_indices = @transform_7, window_bounds = array<i64: 2, 16, 2>}]} {
    %c0 = arith.constant 0 : index
    %c0_0 = arith.constant 0 : index
    %c0_1 = arith.constant 0 : index
    %c0_2 = arith.constant 0 : index
    %0 = vector.load %arg1[%c0, %c0_0, %c0_1, %c0_2] : memref<2x3x16x128xbf16, #tpu.memory_space<vmem>>, vector<2x3x16x128xbf16>
    %1 = vector.extract_strided_slice %0 {offsets = [0, 0, 0, 0], sizes = [2, 1, 16, 128], strides = [1, 1, 1, 1]} : vector<2x3x16x128xbf16> to vector<2x1x16x128xbf16>
    %2 = vector.shape_cast %1 : vector<2x1x16x128xbf16> to vector<2x16x128xbf16>
    %3 = arith.extf %2 : vector<2x16x128xbf16> to vector<2x16x128xf32>
    %4 = vector.extract_strided_slice %0 {offsets = [0, 1, 0, 0], sizes = [2, 1, 16, 128], strides = [1, 1, 1, 1]} : vector<2x3x16x128xbf16> to vector<2x1x16x128xbf16>
    %5 = vector.shape_cast %4 : vector<2x1x16x128xbf16> to vector<2x16x128xbf16>
    %6 = arith.extf %5 : vector<2x16x128xbf16> to vector<2x16x128xf32>
    %7 = arith.addf %3, %6 : vector<2x16x128xf32>
    %8 = vector.extract_strided_slice %0 {offsets = [0, 2, 0, 0], sizes = [2, 1, 16, 128], strides = [1, 1, 1, 1]} : vector<2x3x16x128xbf16> to vector<2x1x16x128xbf16>
    %9 = vector.shape_cast %8 : vector<2x1x16x128xbf16> to vector<2x16x128xbf16>
    %10 = arith.extf %9 : vector<2x16x128xbf16> to vector<2x16x128xf32>
    %11 = arith.addf %7, %10 : vector<2x16x128xf32>
    %12 = vector.shape_cast %11 : vector<2x16x128xf32> to vector<32x128xf32>
    %13 = arith.truncf %12 : vector<32x128xf32> to vector<32x128xbf16>
    %14 = tpu.iota {dimensions = array<i32: 0>} : vector<32x1xi32>
    %c16_i32 = arith.constant 16 : i32
    %c0_i32 = arith.constant 0 : i32
    %15 = arith.cmpi eq, %c16_i32, %c0_i32 : i32
    %c1_i32 = arith.constant 1 : i32
    %16 = arith.select %15, %c1_i32, %c16_i32 : i32
    %17 = vector.broadcast %16 : i32 to vector<32x1xi32>
    %18 = arith.remsi %14, %17 : vector<32x1xi32>
    %c0_i32_3 = arith.constant 0 : i32
    %19 = vector.broadcast %c0_i32_3 : i32 to vector<32x1xi32>
    %20 = arith.cmpi ne, %18, %19 : vector<32x1xi32>
    %c0_i32_4 = arith.constant 0 : i32
    %21 = vector.broadcast %c0_i32_4 : i32 to vector<32x1xi32>
    %22 = arith.cmpi slt, %18, %21 : vector<32x1xi32>
    %c0_i32_5 = arith.constant 0 : i32
    %23 = arith.cmpi slt, %16, %c0_i32_5 : i32
    %24 = vector.broadcast %23 : i1 to vector<32x1xi1>
    %25 = vector.broadcast %24 : vector<32x1xi1> to vector<32x1xi1>
    %26 = arith.xori %22, %25 : vector<32x1xi1>
    %27 = arith.andi %26, %20 : vector<32x1xi1>
    %28 = vector.broadcast %16 : i32 to vector<32x1xi32>
    %29 = arith.addi %18, %28 : vector<32x1xi32>
    %30 = arith.select %27, %29, %18 : vector<32x1xi1>, vector<32x1xi32>
    %c0_i32_6 = arith.constant 0 : i32
    %31 = vector.broadcast %c0_i32_6 : i32 to vector<32x1xi32>
    %32 = arith.cmpi ne, %30, %31 : vector<32x1xi32>
    %c15_i32 = arith.constant 15 : i32
    %33 = vector.broadcast %c15_i32 : i32 to vector<32x1xi32>
    %34 = arith.cmpi ne, %30, %33 : vector<32x1xi32>
    %c0_7 = arith.constant 0 : index
    %c0_8 = arith.constant 0 : index
    %c0_9 = arith.constant 0 : index
    %35 = vector.load %arg2[%c0_7, %c0_8, %c0_9] : memref<3x128x256xbf16, #tpu.memory_space<vmem>>, vector<1x128x256xbf16>
    %36 = vector.shape_cast %35 : vector<1x128x256xbf16> to vector<128x256xbf16>
    %cst = arith.constant dense<0.000000e+00> : vector<32x256xf32>
    %37 = tpu.matmul %13, %36, %cst {dimension_numbers = #tpu.dot_dimension_numbers<[1], [0], [0], [1], [0, 0, 1, 1], [], []>} : vector<32x128xbf16>, vector<128x256xbf16>, vector<32x256xf32> -> vector<32x256xf32>
    %c1 = arith.constant 1 : index
    %c0_10 = arith.constant 0 : index
    %c0_11 = arith.constant 0 : index
    %38 = vector.load %arg2[%c1, %c0_10, %c0_11] : memref<3x128x256xbf16, #tpu.memory_space<vmem>>, vector<1x128x256xbf16>
    %39 = vector.shape_cast %38 : vector<1x128x256xbf16> to vector<128x256xbf16>
    %cst_12 = arith.constant dense<0.000000e+00> : vector<32x256xf32>
    %40 = tpu.matmul %13, %39, %cst_12 {dimension_numbers = #tpu.dot_dimension_numbers<[1], [0], [0], [1], [0, 0, 1, 1], [], []>} : vector<32x128xbf16>, vector<128x256xbf16>, vector<32x256xf32> -> vector<32x256xf32>
    %c2 = arith.constant 2 : index
    %c0_13 = arith.constant 0 : index
    %c0_14 = arith.constant 0 : index
    %41 = vector.load %arg2[%c2, %c0_13, %c0_14] : memref<3x128x256xbf16, #tpu.memory_space<vmem>>, vector<1x128x256xbf16>
    %42 = vector.shape_cast %41 : vector<1x128x256xbf16> to vector<128x256xbf16>
    %cst_15 = arith.constant dense<0.000000e+00> : vector<32x256xf32>
    %43 = tpu.matmul %13, %42, %cst_15 {dimension_numbers = #tpu.dot_dimension_numbers<[1], [0], [0], [1], [0, 0, 1, 1], [], []>} : vector<32x128xbf16>, vector<128x256xbf16>, vector<32x256xf32> -> vector<32x256xf32>
    %c1_i32_16 = arith.constant 1 : i32
    %44 = tpu.dynamic_rotate %37 by %c1_i32_16 dim 0 : vector<32x256xf32>, i32 -> vector<32x256xf32>
    %cst_17 = arith.constant 0.000000e+00 : f32
    %45 = vector.shape_cast %32 : vector<32x1xi1> to vector<32x1xi1>
    %46 = vector.broadcast %45 : vector<32x1xi1> to vector<32x256xi1>
    %47 = vector.broadcast %cst_17 : f32 to vector<32x256xf32>
    %48 = arith.select %46, %44, %47 : vector<32x256xi1>, vector<32x256xf32>
    %c31_i32 = arith.constant 31 : i32
    %49 = tpu.dynamic_rotate %43 by %c31_i32 dim 0 : vector<32x256xf32>, i32 -> vector<32x256xf32>
    %cst_18 = arith.constant 0.000000e+00 : f32
    %50 = vector.shape_cast %34 : vector<32x1xi1> to vector<32x1xi1>
    %51 = vector.broadcast %50 : vector<32x1xi1> to vector<32x256xi1>
    %52 = vector.broadcast %cst_18 : f32 to vector<32x256xf32>
    %53 = arith.select %51, %49, %52 : vector<32x256xi1>, vector<32x256xf32>
    %54 = arith.addf %48, %40 : vector<32x256xf32>
    %55 = arith.addf %54, %53 : vector<32x256xf32>
    %c0_19 = arith.constant 0 : index
    %c0_20 = arith.constant 0 : index
    %56 = vector.load %arg3[%c0_19, %c0_20] : memref<1x256xf32, #tpu.memory_space<vmem>>, vector<1x256xf32>
    %57 = vector.broadcast %56 : vector<1x256xf32> to vector<32x256xf32>
    %58 = arith.addf %55, %57 : vector<32x256xf32>
    %cst_21 = arith.constant 0.000000e+00 : f32
    %59 = vector.broadcast %cst_21 : f32 to vector<32x256xf32>
    %60 = arith.cmpf oge, %58, %59 : vector<32x256xf32>
    %cst_22 = arith.constant 2.000000e-01 : f32
    %61 = vector.broadcast %cst_22 : f32 to vector<32x256xf32>
    %62 = arith.mulf %61, %58 : vector<32x256xf32>
    %63 = arith.select %60, %58, %62 : vector<32x256xi1>, vector<32x256xf32>
    %64 = arith.truncf %63 : vector<32x256xf32> to vector<32x256xbf16>
    %c0_23 = arith.constant 0 : index
    %c0_24 = arith.constant 0 : index
    %c0_25 = arith.constant 0 : index
    %65 = vector.load %arg4[%c0_23, %c0_24, %c0_25] : memref<3x256x128xbf16, #tpu.memory_space<vmem>>, vector<1x256x128xbf16>
    %66 = vector.shape_cast %65 : vector<1x256x128xbf16> to vector<256x128xbf16>
    %cst_26 = arith.constant dense<0.000000e+00> : vector<32x128xf32>
    %67 = tpu.matmul %64, %66, %cst_26 {dimension_numbers = #tpu.dot_dimension_numbers<[1], [0], [0], [1], [0, 0, 1, 1], [], []>} : vector<32x256xbf16>, vector<256x128xbf16>, vector<32x128xf32> -> vector<32x128xf32>
    %c1_27 = arith.constant 1 : index
    %c0_28 = arith.constant 0 : index
    %c0_29 = arith.constant 0 : index
    %68 = vector.load %arg4[%c1_27, %c0_28, %c0_29] : memref<3x256x128xbf16, #tpu.memory_space<vmem>>, vector<1x256x128xbf16>
    %69 = vector.shape_cast %68 : vector<1x256x128xbf16> to vector<256x128xbf16>
    %cst_30 = arith.constant dense<0.000000e+00> : vector<32x128xf32>
    %70 = tpu.matmul %64, %69, %cst_30 {dimension_numbers = #tpu.dot_dimension_numbers<[1], [0], [0], [1], [0, 0, 1, 1], [], []>} : vector<32x256xbf16>, vector<256x128xbf16>, vector<32x128xf32> -> vector<32x128xf32>
    %c2_31 = arith.constant 2 : index
    %c0_32 = arith.constant 0 : index
    %c0_33 = arith.constant 0 : index
    %71 = vector.load %arg4[%c2_31, %c0_32, %c0_33] : memref<3x256x128xbf16, #tpu.memory_space<vmem>>, vector<1x256x128xbf16>
    %72 = vector.shape_cast %71 : vector<1x256x128xbf16> to vector<256x128xbf16>
    %cst_34 = arith.constant dense<0.000000e+00> : vector<32x128xf32>
    %73 = tpu.matmul %64, %72, %cst_34 {dimension_numbers = #tpu.dot_dimension_numbers<[1], [0], [0], [1], [0, 0, 1, 1], [], []>} : vector<32x256xbf16>, vector<256x128xbf16>, vector<32x128xf32> -> vector<32x128xf32>
    %c1_i32_35 = arith.constant 1 : i32
    %74 = tpu.dynamic_rotate %67 by %c1_i32_35 dim 0 : vector<32x128xf32>, i32 -> vector<32x128xf32>
    %cst_36 = arith.constant 0.000000e+00 : f32
    %75 = vector.shape_cast %32 : vector<32x1xi1> to vector<32x1xi1>
    %76 = vector.broadcast %75 : vector<32x1xi1> to vector<32x128xi1>
    %77 = vector.broadcast %cst_36 : f32 to vector<32x128xf32>
    %78 = arith.select %76, %74, %77 : vector<32x128xi1>, vector<32x128xf32>
    %c31_i32_37 = arith.constant 31 : i32
    %79 = tpu.dynamic_rotate %73 by %c31_i32_37 dim 0 : vector<32x128xf32>, i32 -> vector<32x128xf32>
    %cst_38 = arith.constant 0.000000e+00 : f32
    %80 = vector.shape_cast %34 : vector<32x1xi1> to vector<32x1xi1>
    %81 = vector.broadcast %80 : vector<32x1xi1> to vector<32x128xi1>
    %82 = vector.broadcast %cst_38 : f32 to vector<32x128xf32>
    %83 = arith.select %81, %79, %82 : vector<32x128xi1>, vector<32x128xf32>
    %84 = arith.addf %78, %70 : vector<32x128xf32>
    %85 = arith.addf %84, %83 : vector<32x128xf32>
    %c0_39 = arith.constant 0 : index
    %c0_40 = arith.constant 0 : index
    %86 = vector.load %arg5[%c0_39, %c0_40] : memref<1x128xf32, #tpu.memory_space<vmem>>, vector<1x128xf32>
    %87 = vector.broadcast %86 : vector<1x128xf32> to vector<32x128xf32>
    %88 = arith.addf %85, %87 : vector<32x128xf32>
    %cst_41 = arith.constant 0.000000e+00 : f32
    %89 = vector.broadcast %cst_41 : f32 to vector<32x128xf32>
    %90 = arith.cmpf oge, %88, %89 : vector<32x128xf32>
    %cst_42 = arith.constant 2.000000e-01 : f32
    %91 = vector.broadcast %cst_42 : f32 to vector<32x128xf32>
    %92 = arith.mulf %91, %88 : vector<32x128xf32>
    %93 = arith.select %90, %88, %92 : vector<32x128xi1>, vector<32x128xf32>
    %94 = arith.truncf %93 : vector<32x128xf32> to vector<32x128xbf16>
    %c0_43 = arith.constant 0 : index
    %c0_44 = arith.constant 0 : index
    %c0_45 = arith.constant 0 : index
    %95 = vector.load %arg6[%c0_43, %c0_44, %c0_45] : memref<3x128x2xbf16, #tpu.memory_space<vmem>>, vector<1x128x2xbf16>
    %96 = vector.shape_cast %95 : vector<1x128x2xbf16> to vector<128x2xbf16>
    %cst_46 = arith.constant dense<0.000000e+00> : vector<32x2xf32>
    %97 = tpu.matmul %94, %96, %cst_46 {dimension_numbers = #tpu.dot_dimension_numbers<[1], [0], [0], [1], [0, 0, 1, 1], [], []>} : vector<32x128xbf16>, vector<128x2xbf16>, vector<32x2xf32> -> vector<32x2xf32>
    %c1_47 = arith.constant 1 : index
    %c0_48 = arith.constant 0 : index
    %c0_49 = arith.constant 0 : index
    %98 = vector.load %arg6[%c1_47, %c0_48, %c0_49] : memref<3x128x2xbf16, #tpu.memory_space<vmem>>, vector<1x128x2xbf16>
    %99 = vector.shape_cast %98 : vector<1x128x2xbf16> to vector<128x2xbf16>
    %cst_50 = arith.constant dense<0.000000e+00> : vector<32x2xf32>
    %100 = tpu.matmul %94, %99, %cst_50 {dimension_numbers = #tpu.dot_dimension_numbers<[1], [0], [0], [1], [0, 0, 1, 1], [], []>} : vector<32x128xbf16>, vector<128x2xbf16>, vector<32x2xf32> -> vector<32x2xf32>
    %c2_51 = arith.constant 2 : index
    %c0_52 = arith.constant 0 : index
    %c0_53 = arith.constant 0 : index
    %101 = vector.load %arg6[%c2_51, %c0_52, %c0_53] : memref<3x128x2xbf16, #tpu.memory_space<vmem>>, vector<1x128x2xbf16>
    %102 = vector.shape_cast %101 : vector<1x128x2xbf16> to vector<128x2xbf16>
    %cst_54 = arith.constant dense<0.000000e+00> : vector<32x2xf32>
    %103 = tpu.matmul %94, %102, %cst_54 {dimension_numbers = #tpu.dot_dimension_numbers<[1], [0], [0], [1], [0, 0, 1, 1], [], []>} : vector<32x128xbf16>, vector<128x2xbf16>, vector<32x2xf32> -> vector<32x2xf32>
    %c1_i32_55 = arith.constant 1 : i32
    %104 = tpu.dynamic_rotate %97 by %c1_i32_55 dim 0 : vector<32x2xf32>, i32 -> vector<32x2xf32>
    %cst_56 = arith.constant 0.000000e+00 : f32
    %105 = vector.shape_cast %32 : vector<32x1xi1> to vector<32x1xi1>
    %106 = vector.broadcast %105 : vector<32x1xi1> to vector<32x2xi1>
    %107 = vector.broadcast %cst_56 : f32 to vector<32x2xf32>
    %108 = arith.select %106, %104, %107 : vector<32x2xi1>, vector<32x2xf32>
    %c31_i32_57 = arith.constant 31 : i32
    %109 = tpu.dynamic_rotate %103 by %c31_i32_57 dim 0 : vector<32x2xf32>, i32 -> vector<32x2xf32>
    %cst_58 = arith.constant 0.000000e+00 : f32
    %110 = vector.shape_cast %34 : vector<32x1xi1> to vector<32x1xi1>
    %111 = vector.broadcast %110 : vector<32x1xi1> to vector<32x2xi1>
    %112 = vector.broadcast %cst_58 : f32 to vector<32x2xf32>
    %113 = arith.select %111, %109, %112 : vector<32x2xi1>, vector<32x2xf32>
    %114 = arith.addf %108, %100 : vector<32x2xf32>
    %115 = arith.addf %114, %113 : vector<32x2xf32>
    %c0_59 = arith.constant 0 : index
    %c0_60 = arith.constant 0 : index
    %116 = vector.load %arg7[%c0_59, %c0_60] : memref<1x2xf32, #tpu.memory_space<vmem>>, vector<1x2xf32>
    %117 = vector.broadcast %116 : vector<1x2xf32> to vector<32x2xf32>
    %118 = arith.addf %115, %117 : vector<32x2xf32>
    %119 = vector.shape_cast %118 : vector<32x2xf32> to vector<2x16x2xf32>
    %c0_61 = arith.constant 0 : index
    %c0_62 = arith.constant 0 : index
    %c0_63 = arith.constant 0 : index
    %120 = vector.load %arg8[%c0_61, %c0_62, %c0_63] : memref<2x16x2xf32, #tpu.memory_space<vmem>>, vector<2x16x2xf32>
    tpu.vector_store %arg8[%c0_61, %c0_62, %c0_63], %119 {strides = array<i32>} : memref<2x16x2xf32, #tpu.memory_space<vmem>>, vector<2x16x2xf32>,
    return
  }
  func.func @transform_0(%arg0: i32) -> (i32, i32, i32, i32) {
    %c0_i32 = arith.constant 0 : i32
    %c0_i32_0 = arith.constant 0 : i32
    %c0_i32_1 = arith.constant 0 : i32
    %c0_i32_2 = arith.constant 0 : i32
    return %arg0, %c0_i32, %c0_i32_0, %c0_i32_1 : i32, i32, i32, i32
  }
  func.func @transform_1(%arg0: i32) -> (i32, i32, i32) {
    %c0_i32 = arith.constant 0 : i32
    %c0_i32_0 = arith.constant 0 : i32
    %c0_i32_1 = arith.constant 0 : i32
    %c0_i32_2 = arith.constant 0 : i32
    return %c0_i32, %c0_i32_0, %c0_i32_1 : i32, i32, i32
  }
  func.func @transform_2(%arg0: i32) -> (i32, i32) {
    %c0_i32 = arith.constant 0 : i32
    %c0_i32_0 = arith.constant 0 : i32
    %c0_i32_1 = arith.constant 0 : i32
    return %c0_i32, %c0_i32_0 : i32, i32
  }
  func.func @transform_3(%arg0: i32) -> (i32, i32, i32) {
    %c0_i32 = arith.constant 0 : i32
    %c0_i32_0 = arith.constant 0 : i32
    %c0_i32_1 = arith.constant 0 : i32
    %c0_i32_2 = arith.constant 0 : i32
    return %c0_i32, %c0_i32_0, %c0_i32_1 : i32, i32, i32
  }
  func.func @transform_4(%arg0: i32) -> (i32, i32) {
    %c0_i32 = arith.constant 0 : i32
    %c0_i32_0 = arith.constant 0 : i32
    %c0_i32_1 = arith.constant 0 : i32
    return %c0_i32, %c0_i32_0 : i32, i32
  }
  func.func @transform_5(%arg0: i32) -> (i32, i32, i32) {
    %c0_i32 = arith.constant 0 : i32
    %c0_i32_0 = arith.constant 0 : i32
    %c0_i32_1 = arith.constant 0 : i32
    %c0_i32_2 = arith.constant 0 : i32
    return %c0_i32, %c0_i32_0, %c0_i32_1 : i32, i32, i32
  }
  func.func @transform_6(%arg0: i32) -> (i32, i32) {
    %c0_i32 = arith.constant 0 : i32
    %c0_i32_0 = arith.constant 0 : i32
    %c0_i32_1 = arith.constant 0 : i32
    return %c0_i32, %c0_i32_0 : i32, i32
  }
  func.func @transform_7(%arg0: i32) -> (i32, i32, i32) {
    %c0_i32 = arith.constant 0 : i32
    %c0_i32_0 = arith.constant 0 : i32
    %c0_i32_1 = arith.constant 0 : i32
    return %arg0, %c0_i32, %c0_i32_0 : i32, i32, i32
  }
}

</mosaic_0001>

<llo_original>
// kernel: tweet_head_pallas.1
$region0: #{tweet_head_pallas.1}
  #allocation0 [shape = 'u32[]', space=smem, size = 0x4, offset = 0x4, fixed_abs, tag = 'smem constant byte address 0x4 - core index']
  #allocation1 [shape = 'u32[144,128]{1,0:T(1,128)}', space=vmem, size = 0x12000, scoped, tag = 'internal scratch']
  %s0 = inlined_call_operand.vmem [shape: bf16[4,3,16,128], index: 0, kind: input, shape index: {}]
  %s1 = inlined_call_operand.vmem [shape: bf16[3,128,256], index: 1, kind: input, shape index: {}]
  %s2 = inlined_call_operand.vmem [shape: f32[1,256], index: 2, kind: input, shape index: {}]
  %s3 = inlined_call_operand.vmem [shape: bf16[3,256,128], index: 3, kind: input, shape index: {}]
  %s4 = inlined_call_operand.vmem [shape: f32[1,128], index: 4, kind: input, shape index: {}]
  %s5 = inlined_call_operand.vmem [shape: bf16[3,128,2], index: 5, kind: input, shape index: {}]
  %s6 = inlined_call_operand.vmem [shape: f32[1,2], index: 6, kind: input, shape index: {}]
  %s7 = inlined_call_operand.vmem [shape: f32[4,16,2], index: 7, kind: output, shape index: {}]
  %s8 = sld [smem:[#allocation0]]
  $region61: #{tweet_head_pallas.1} parent=0
    _
  %s10 = ssub.s32 1, %s8
  %s11 = scalar_select 0, %s10, %s8
  loop: start=0, step=1, limit=4
  $region2: #{tweet_head_pallas.1} parent=0 // loop_pre_header
    _
  $region3: #{tweet_head_pallas.1} parent=0 // loop_header
    %s13 = sphi 0, %s17
    %p14 = scmp.ge.s32.totalorder %s13, 4
    %s23 = sphi 0, %s25
    %s26 = sphi 0, %s23
    %s27 = sphi 0, %s26
    %s43 = sphi 0, %s27
    %s47 = sphi 0, %s47
    %s49 = sphi 0, %s47
    %s50 = sphi 0, %s49
    %s64 = sphi 0, %s50
    %s68 = sphi 0, %s68
    %s70 = sphi 0, %s68
    %s71 = sphi 0, %s70
    %s85 = sphi 0, %s71
    %s89 = sphi 0, %s89
    %s91 = sphi 0, %s89
    %s92 = sphi 0, %s91
    %s106 = sphi 0, %s92
    %s110 = sphi 0, %s110
    %s112 = sphi 0, %s110
    %s113 = sphi 0, %s112
    %s127 = sphi 0, %s113
    %s131 = sphi 0, %s131
    %s133 = sphi 0, %s131
    %s134 = sphi 0, %s133
    %s148 = sphi 0, %s134
    %s152 = sphi 0, %s152
    %s154 = sphi 0, %s152
    %s155 = sphi 0, %s154
    %s169 = sphi 0, %s155
    %s175 = sphi 0, %s177
    %s178 = sphi 0, %s175
    %s179 = sphi 0, %s178
    %s195 = sphi 0, %s179
  $region4: #{tweet_head_pallas.1} parent=0 // loop_header_branch
    %16 = sbr.rel (%p14) target = $region8
  $region5: #{tweet_head_pallas.1} parent=0 // loop_body
    %s18 = ssub.s32 %s13, 1
    %s19 = ssub.s32 %s13, 2
    %s20 = sadd.s32 %s13, 1
    %s21 = ssub.s32 %s13, %s20
    %p22 = scmp.eq.s32.totalorder %s21, 0
    %s24 = sadd.s32 %s23, 1
    %s25 = scalar_select %p22, %s23, %s24
    %p28 = pneg %p22
    %p29 = scmp.eq.s32.totalorder %s13, 1
    %p30 = por %p28, %p29
    %p31 = scmp.ne.s32.totalorder %s23, %s26
    %p32 = scmp.eq.s32.totalorder %s13, 0
    %p33 = por %p31, %p32
    %p34 = scmp.ne.s32.totalorder %s23, %s26
    %p35 = scmp.eq.s32.totalorder %s18, 1
    %p36 = por %p34, %p35
    %p37 = scmp.ne.s32.totalorder %s26, %s27
    %p38 = scmp.eq.s32.totalorder %s18, 0
    %p39 = por %p37, %p38
    %p40 = scmp.ne.s32.totalorder %s26, %s27
    %p41 = scmp.eq.s32.totalorder %s19, 1
    %p42 = por %p40, %p41
    %p44 = scmp.ne.s32.totalorder %s27, %s43
    %p45 = scmp.eq.s32.totalorder %s19, 0
    %p46 = por %p44, %p45
    %s48 = sadd.s32 %s47, 1
    %p51 = scmp.eq.s32.totalorder %s13, 1
    %p52 = scmp.ne.s32.totalorder %s47, %s49
    %p53 = scmp.eq.s32.totalorder %s13, 0
    %p54 = por %p52, %p53
    %p55 = scmp.ne.s32.totalorder %s47, %s49
    %p56 = scmp.eq.s32.totalorder %s18, 1
    %p57 = por %p55, %p56
    %p58 = scmp.ne.s32.totalorder %s49, %s50
    %p59 = scmp.eq.s32.totalorder %s18, 0
    %p60 = por %p58, %p59
    %p61 = scmp.ne.s32.totalorder %s49, %s50
    %p62 = scmp.eq.s32.totalorder %s19, 1
    %p63 = por %p61, %p62
    %p65 = scmp.ne.s32.totalorder %s50, %s64
    %p66 = scmp.eq.s32.totalorder %s19, 0
    %p67 = por %p65, %p66
    %s69 = sadd.s32 %s68, 1
    %p72 = scmp.eq.s32.totalorder %s13, 1
    %p73 = scmp.ne.s32.totalorder %s68, %s70
    %p74 = scmp.eq.s32.totalorder %s13, 0
    %p75 = por %p73, %p74
    %p76 = scmp.ne.s32.totalorder %s68, %s70
    %p77 = scmp.eq.s32.totalorder %s18, 1
    %p78 = por %p76, %p77
    %p79 = scmp.ne.s32.totalorder %s70, %s71
    %p80 = scmp.eq.s32.totalorder %s18, 0
    %p81 = por %p79, %p80
    %p82 = scmp.ne.s32.totalorder %s70, %s71
    %p83 = scmp.eq.s32.totalorder %s19, 1
    %p84 = por %p82, %p83
    %p86 = scmp.ne.s32.totalorder %s71, %s85
    %p87 = scmp.eq.s32.totalorder %s19, 0
    %p88 = por %p86, %p87
    %s90 = sadd.s32 %s89, 1
    %p93 = scmp.eq.s32.totalorder %s13, 1
    %p94 = scmp.ne.s32.totalorder %s89, %s91
    %p95 = scmp.eq.s32.totalorder %s13, 0
    %p96 = por %p94, %p95
    %p97 = scmp.ne.s32.totalorder %s89, %s91
    %p98 = scmp.eq.s32.totalorder %s18, 1
    %p99 = por %p97, %p98
    %p100 = scmp.ne.s32.totalorder %s91, %s92
    %p101 = scmp.eq.s32.totalorder %s18, 0
    %p102 = por %p100, %p101
    %p103 = scmp.ne.s32.totalorder %s91, %s92
    %p104 = scmp.eq.s32.totalorder %s19, 1
    %p105 = por %p103, %p104
    %p107 = scmp.ne.s32.totalorder %s92, %s106
    %p108 = scmp.eq.s32.totalorder %s19, 0
    %p109 = por %p107, %p108
    %s111 = sadd.s32 %s110, 1
    %p114 = scmp.eq.s32.totalorder %s13, 1
    %p115 = scmp.ne.s32.totalorder %s110, %s112
    %p116 = scmp.eq.s32.totalorder %s13, 0
    %p117 = por %p115, %p116
    %p118 = scmp.ne.s32.totalorder %s110, %s112
    %p119 = scmp.eq.s32.totalorder %s18, 1
    %p120 = por %p118, %p119
    %p121 = scmp.ne.s32.totalorder %s112, %s113
    %p122 = scmp.eq.s32.totalorder %s18, 0
    %p123 = por %p121, %p122
    %p124 = scmp.ne.s32.totalorder %s112, %s113
    %p125 = scmp.eq.s32.totalorder %s19, 1
    %p126 = por %p124, %p125
    %p128 = scmp.ne.s32.totalorder %s113, %s127
    %p129 = scmp.eq.s32.totalorder %s19, 0
    %p130 = por %p128, %p129
    %s132 = sadd.s32 %s131, 1
    %p135 = scmp.eq.s32.totalorder %s13, 1
    %p136 = scmp.ne.s32.totalorder %s131, %s133
    %p137 = scmp.eq.s32.totalorder %s13, 0
    %p138 = por %p136, %p137
    %p139 = scmp.ne.s32.totalorder %s131, %s133
    %p140 = scmp.eq.s32.totalorder %s18, 1
    %p141 = por %p139, %p140
    %p142 = scmp.ne.s32.totalorder %s133, %s134
    %p143 = scmp.eq.s32.totalorder %s18, 0
    %p144 = por %p142, %p143
    %p145 = scmp.ne.s32.totalorder %s133, %s134
    %p146 = scmp.eq.s32.totalorder %s19, 1
    %p147 = por %p145, %p146
    %p149 = scmp.ne.s32.totalorder %s134, %s148
    %p150 = scmp.eq.s32.totalorder %s19, 0
    %p151 = por %p149, %p150
    %s153 = sadd.s32 %s152, 1
    %p156 = scmp.eq.s32.totalorder %s13, 1
    %p157 = scmp.ne.s32.totalorder %s152, %s154
    %p158 = scmp.eq.s32.totalorder %s13, 0
    %p159 = por %p157, %p158
    %p160 = scmp.ne.s32.totalorder %s152, %s154
    %p161 = scmp.eq.s32.totalorder %s18, 1
    %p162 = por %p160, %p161
    %p163 = scmp.ne.s32.totalorder %s154, %s155
    %p164 = scmp.eq.s32.totalorder %s18, 0
    %p165 = por %p163, %p164
    %p166 = scmp.ne.s32.totalorder %s154, %s155
    %p167 = scmp.eq.s32.totalorder %s19, 1
    %p168 = por %p166, %p167
    %p170 = scmp.ne.s32.totalorder %s155, %s169
    %p171 = scmp.eq.s32.totalorder %s19, 0
    %p172 = por %p170, %p171
    %s173 = ssub.s32 %s13, %s20
    %p174 = scmp.eq.s32.totalorder %s173, 0
    %s176 = sadd.s32 %s175, 1
    %s177 = scalar_select %p174, %s175, %s176
    %p180 = pneg %p174
    %p181 = scmp.eq.s32.totalorder %s13, 1
    %p182 = por %p180, %p181
    %p183 = scmp.ne.s32.totalorder %s175, %s178
    %p184 = scmp.eq.s32.totalorder %s13, 0
    %p185 = por %p183, %p184
    %p186 = scmp.ne.s32.totalorder %s175, %s178
    %p187 = scmp.eq.s32.totalorder %s18, 1
    %p188 = por %p186, %p187
    %p189 = scmp.ne.s32.totalorder %s178, %s179
    %p190 = scmp.eq.s32.totalorder %s18, 0
    %p191 = por %p189, %p190
    %p192 = scmp.ne.s32.totalorder %s178, %s179
    %p193 = scmp.eq.s32.totalorder %s19, 1
    %p194 = por %p192, %p193
    %p196 = scmp.ne.s32.totalorder %s179, %s195
    %p197 = scmp.eq.s32.totalorder %s19, 0
    %p198 = por %p196, %p197
    %p199 = scmp.le.s32.totalorder 1, %s13
    %p200 = scmp.lt.s32.totalorder %s13, 3
    %p201 = pnand %p199, %p200
    %p202 = pneg %p201
    // Predicated region
    $region9: #{tweet_head_pallas.1} parent=5 // pred_check
      _
    $region10: #{tweet_head_pallas.1} parent=5 // pred_check_branch
      %204 = sbr.rel (%p201) target = $region12
    $region11: #{tweet_head_pallas.1} parent=5 // pred_region
      %s205 = ssub.s32 %s13, 1
      // Predicated region
      $region13: #{tweet_head_pallas.1} parent=11 // pred_check
        %p206 = pneg %p60
      $region14: #{tweet_head_pallas.1} parent=11 // pred_check_branch
        %208 = sbr.rel (%p206) target = $region16
      $region15: #{tweet_head_pallas.1} parent=11 // pred_region
        _
      $region16: #{tweet_head_pallas.1} parent=11 // pred_fallthru
        _
      // Predicated region
      $region17: #{tweet_head_pallas.1} parent=11 // pred_check
        %p209 = pneg %p81
      $region18: #{tweet_head_pallas.1} parent=11 // pred_check_branch
        %211 = sbr.rel (%p209) target = $region20
      $region19: #{tweet_head_pallas.1} parent=11 // pred_region
        _
      $region20: #{tweet_head_pallas.1} parent=11 // pred_fallthru
        _
      // Predicated region
      $region21: #{tweet_head_pallas.1} parent=11 // pred_check
        %p212 = pneg %p102
      $region22: #{tweet_head_pallas.1} parent=11 // pred_check_branch
        %214 = sbr.rel (%p212) target = $region24
      $region23: #{tweet_head_pallas.1} parent=11 // pred_region
        _
      $region24: #{tweet_head_pallas.1} parent=11 // pred_fallthru
        _
      // Predicated region
      $region25: #{tweet_head_pallas.1} parent=11 // pred_check
        %p215 = pneg %p123
      $region26: #{tweet_head_pallas.1} parent=11 // pred_check_branch
        %217 = sbr.rel (%p215) target = $region28
      $region27: #{tweet_head_pallas.1} parent=11 // pred_region
        _
      $region28: #{tweet_head_pallas.1} parent=11 // pred_fallthru
        _
      // Predicated region
      $region29: #{tweet_head_pallas.1} parent=11 // pred_check
        %p218 = pneg %p144
      $region30: #{tweet_head_pallas.1} parent=11 // pred_check_branch
        %220 = sbr.rel (%p218) target = $region32
      $region31: #{tweet_head_pallas.1} parent=11 // pred_region
        _
      $region32: #{tweet_head_pallas.1} parent=11 // pred_fallthru
        _
      // Predicated region
      $region33: #{tweet_head_pallas.1} parent=11 // pred_check
        %p221 = pneg %p165
      $region34: #{tweet_head_pallas.1} parent=11 // pred_check_branch
        %223 = sbr.rel (%p221) target = $region36
      $region35: #{tweet_head_pallas.1} parent=11 // pred_region
        _
      $region36: #{tweet_head_pallas.1} parent=11 // pred_fallthru
        _
    $region12: #{tweet_head_pallas.1} parent=5 // pred_fallthru
      _
    %p224 = scmp.lt.s32.totalorder %s13, 2
    // Predicated region
    $region37: #{tweet_head_pallas.1} parent=5 // pred_check
      %p225 = pneg %p224
    $region38: #{tweet_head_pallas.1} parent=5 // pred_check_branch
      %227 = sbr.rel (%p225) target = $region40
    $region39: #{tweet_head_pallas.1} parent=5 // pred_region
      // Predicated region
      $region41: #{tweet_head_pallas.1} parent=39 // pred_check
        %p228 = pneg %p33
      $region42: #{tweet_head_pallas.1} parent=39 // pred_check_branch
        %230 = sbr.rel (%p228) target = $region44
      $region43: #{tweet_head_pallas.1} parent=39 // pred_region
        %s231 = smul.u32 2, %s13
        %p232 = scmp.lt.s32.totalorder %s231, 3
        %s233 = scalar_select %p232, %s231, 3
        %s234 = smul.addr %s233, 6
        %s235 = smul.addr %s234, 4
        %s236 = scalar_lea.vmem %s0, %s235
        %s237 = smul.u32 2, %s13
      $region44: #{tweet_head_pallas.1} parent=39 // pred_fallthru
        _
    $region40: #{tweet_head_pallas.1} parent=5 // pred_fallthru
      _
    %p238 = scmp.le.s32.totalorder 1, %s13
    %p239 = scmp.lt.s32.totalorder %s13, 3
    %p240 = pnand %p238, %p239
    %p241 = pneg %p240
    // Predicated region
    $region45: #{tweet_head_pallas.1} parent=5 // pred_check
      _
    $region46: #{tweet_head_pallas.1} parent=5 // pred_check_branch
      %243 = sbr.rel (%p240) target = $region48
    $region47: #{tweet_head_pallas.1} parent=5 // pred_region
      %s244 = ssub.s32 %s13, 1
      %s245 = smul.u32 2, %s18
      %p246 = scmp.lt.s32.totalorder %s245, 3
      %s247 = scalar_select %p246, %s245, 3
      %s248 = smul.addr %s247, 6
      %s249 = smul.addr %s248, 4
      %s250 = scalar_lea.vmem %s0, %s249
      %p251 = pneg %p39
      %p252 = pneg %p36
      %p253 = pneg %p60
      %p254 = pneg %p57
      %p255 = pneg %p81
      %p256 = pneg %p78
      %p257 = pneg %p102
      %p258 = pneg %p99
      %p259 = pneg %p123
      %p260 = pneg %p120
      %p261 = pneg %p144
      %p262 = pneg %p141
      %p263 = pneg %p165
      %p264 = pneg %p162
      %p265 = pneg %p191
      %p266 = pneg %p188
      %s267 = smul.u32 2, %s18
      %p268 = scmp.lt.s32.totalorder %s267, 3
      %s269 = scalar_select %p268, %s267, 3
      %s270 = smul.addr %s269, 2
      %s271 = smul.addr %s270, 8
      %s272 = scalar_lea.vmem %s7, %s271
      %s273 = smul.u32 2, %s18
      %p274 = scmp.lt.s32.totalorder %s273, 3
      %s275 = scalar_select %p274, %s273, 3
      %s276 = smul.addr %s275, 6
      %s277 = smul.addr %s276, 4
      %s278 = scalar_lea.vmem %s0, %s277
      %s279 = smul.u32 2, %s18
      %s280 = smul.u32 2, %s18
      %p281 = scmp.lt.s32.totalorder %s280, 3
      %s282 = scalar_select %p281, %s280, 3
      %s283 = smul.addr %s282, 2
      %s284 = smul.addr %s283, 8
      %s285 = scalar_lea.vmem %s7, %s284
      %s286 = smul.u32 2, %s18
      %v288 = vld [vmem:[%s278] sm:$0xf]
      %v289 = vld [vmem:[%s278 + $0x4] sm:$0xf]
      %v290 = vld [vmem:[%s278 + $0x8] sm:$0xf]
      %v291 = vld [vmem:[%s278 + $0xc] sm:$0xf]
      %v292 = vld [vmem:[%s278 + $0x10] sm:$0xf]
      %v293 = vld [vmem:[%s278 + $0x14] sm:$0xf]
      %v294 = vld [vmem:[%s278 + $0x18] sm:$0xf]
      %v295 = vld [vmem:[%s278 + $0x1c] sm:$0xf]
      %v296 = vld [vmem:[%s278 + $0x20] sm:$0xf]
      %v297 = vld [vmem:[%s278 + $0x24] sm:$0xf]
      %v298 = vld [vmem:[%s278 + $0x28] sm:$0xf]
      %v299 = vld [vmem:[%s278 + $0x2c] sm:$0xf]
      %v300 = vunpack.c.l.bf16 %v288
      %v301 = vunpack.c.l.bf16 %v289
      %v302 = vunpack.c.l.bf16 %v294
      %v303 = vunpack.c.l.bf16 %v295
      %v304 = vunpack.c.l.bf16 %v290
      %v305 = vunpack.c.l.bf16 %v291
      %v306 = vunpack.c.l.bf16 %v296
      %v307 = vunpack.c.l.bf16 %v297
      %v308 = vadd.f32 %v300, %v304
      %v309 = vadd.f32 %v301, %v305
      %v310 = vadd.f32 %v302, %v306
      %v311 = vadd.f32 %v303, %v307
      %v312 = vunpack.c.l.bf16 %v292
      %v313 = vunpack.c.l.bf16 %v293
      %v314 = vunpack.c.l.bf16 %v298
      %v315 = vunpack.c.l.bf16 %v299
      %v316 = vadd.f32 %v308, %v312
      %v317 = vadd.f32 %v309, %v313
      %v318 = vadd.f32 %v310, %v314
      %v319 = vadd.f32 %v311, %v315
      %v320 = vpack.c.bf16 %v317, %v316
      %v321 = vpack.c.bf16 %v319, %v318
      %v322 = vlaneseq
      %v323 = vshrl.u32 %v322, 7
      %v324 = vadd.s32 %v323, 8
      %v325 = vadd.s32 %v323, 16
      %v326 = vadd.s32 %v323, 24
      %vm327 = vcmp.lt.s32.totalorder %v323, 0
      %v328 = vsub.s32 0, %v323
      %v329 = vsel %vm327, %v328, %v323
      %v330 = vshrl.u32 %v329, 4
      %v331 = vand.u32 %v329, 15
      %v332 = vsub.s32 0, %v331
      %v333 = vsel %vm327, %v332, %v331
      %vm334 = vcmp.lt.s32.totalorder %v324, 0
      %v335 = vsub.s32 0, %v324
      %v336 = vsel %vm334, %v335, %v324
      %v337 = vshrl.u32 %v336, 4
      %v338 = vand.u32 %v336, 15
      %v339 = vsub.s32 0, %v338
      %v340 = vsel %vm334, %v339, %v338
      %vm341 = vcmp.lt.s32.totalorder %v325, 0
      %v342 = vsub.s32 0, %v325
      %v343 = vsel %vm341, %v342, %v325
      %v344 = vshrl.u32 %v343, 4
      %v345 = vand.u32 %v343, 15
      %v346 = vsub.s32 0, %v345
      %v347 = vsel %vm341, %v346, %v345
      %vm348 = vcmp.lt.s32.totalorder %v326, 0
      %v349 = vsub.s32 0, %v326
      %v350 = vsel %vm348, %v349, %v326
      %v351 = vshrl.u32 %v350, 4
      %v352 = vand.u32 %v350, 15
      %v353 = vsub.s32 0, %v352
      %v354 = vsel %vm348, %v353, %v352
      %vm355 = vcmp.ne.s32.totalorder %v333, 0
      %vm356 = vcmp.ne.s32.totalorder %v340, 0
      %vm357 = vcmp.ne.s32.totalorder %v347, 0
      %vm358 = vcmp.ne.s32.totalorder %v354, 0
      %vm359 = vcmp.lt.s32.totalorder %v333, 0
      %vm360 = vcmp.lt.s32.totalorder %v340, 0
      %vm361 = vcmp.lt.s32.totalorder %v347, 0
      %vm362 = vcmp.lt.s32.totalorder %v354, 0
      %vm363 = vmand %vm359, %vm355
      %vm364 = vmand %vm360, %vm356
      %vm365 = vmand %vm361, %vm357
      %vm366 = vmand %vm362, %vm358
      %v367 = vadd.s32 %v333, 16
      %v368 = vadd.s32 %v340, 16
      %v369 = vadd.s32 %v347, 16
      %v370 = vadd.s32 %v354, 16
      %v371 = vsel %vm363, %v367, %v333
      %v372 = vsel %vm364, %v368, %v340
      %v373 = vsel %vm365, %v369, %v347
      %v374 = vsel %vm366, %v370, %v354
      %vm375 = vcmp.ne.s32.totalorder %v371, 0
      %vm376 = vcmp.ne.s32.totalorder %v372, 0
      %vm377 = vcmp.ne.s32.totalorder %v373, 0
      %vm378 = vcmp.ne.s32.totalorder %v374, 0
      %vm379 = vcmp.ne.s32.totalorder %v371, 15
      %vm380 = vcmp.ne.s32.totalorder %v372, 15
      %vm381 = vcmp.ne.s32.totalorder %v373, 15
      %vm382 = vcmp.ne.s32.totalorder %v374, 15
      %v383 = vld [vmem:[%s1] sm:$0xff]
      %v384 = vld [vmem:[%s1 + $0x8] sm:$0xff]
      %v385 = vld [vmem:[%s1 + $0x10] sm:$0xff]
      %v386 = vld [vmem:[%s1 + $0x18] sm:$0xff]
      %v387 = vld [vmem:[%s1 + $0x20] sm:$0xff]
      %v388 = vld [vmem:[%s1 + $0x28] sm:$0xff]
      %v389 = vld [vmem:[%s1 + $0x30] sm:$0xff]
      %v390 = vld [vmem:[%s1 + $0x38] sm:$0xff]
      %v391 = vld [vmem:[%s1 + $0x40] sm:$0xff]
      %v392 = vld [vmem:[%s1 + $0x48] sm:$0xff]
      %v393 = vld [vmem:[%s1 + $0x50] sm:$0xff]
      %v394 = vld [vmem:[%s1 + $0x58] sm:$0xff]
      %v395 = vld [vmem:[%s1 + $0x60] sm:$0xff]
      %v396 = vld [vmem:[%s1 + $0x68] sm:$0xff]
      %v397 = vld [vmem:[%s1 + $0x70] sm:$0xff]
      %v398 = vld [vmem:[%s1 + $0x78] sm:$0xff]
      %v415 = vunpack.c.l.b16 %v383
      %v416 = vunpack.c.h.b16 %v383
      %v417 = vunpack.c.l.b16 %v384
      %v418 = vunpack.c.h.b16 %v384
      %v419 = vunpack.c.l.b16 %v385
      %v420 = vunpack.c.h.b16 %v385
      %v421 = vunpack.c.l.b16 %v386
      %v422 = vunpack.c.h.b16 %v386
      %v423 = vunpack.c.l.b16 %v387
      %v424 = vunpack.c.h.b16 %v387
      %v425 = vunpack.c.l.b16 %v388
      %v426 = vunpack.c.h.b16 %v388
      %v427 = vunpack.c.l.b16 %v389
      %v428 = vunpack.c.h.b16 %v389
      %v429 = vunpack.c.l.b16 %v390
      %v430 = vunpack.c.h.b16 %v390
      %v431 = vunpack.c.l.b16 %v391
      %v432 = vunpack.c.h.b16 %v391
      %v433 = vunpack.c.l.b16 %v392
      %v434 = vunpack.c.h.b16 %v392
      %v435 = vunpack.c.l.b16 %v393
      %v436 = vunpack.c.h.b16 %v393
      %v437 = vunpack.c.l.b16 %v394
      %v438 = vunpack.c.h.b16 %v394
      %v439 = vunpack.c.l.b16 %v395
      %v440 = vunpack.c.h.b16 %v395
      %v441 = vunpack.c.l.b16 %v396
      %v442 = vunpack.c.h.b16 %v396
      %v443 = vunpack.c.l.b16 %v397
      %v444 = vunpack.c.h.b16 %v397
      %v445 = vunpack.c.l.b16 %v398
      %v446 = vunpack.c.h.b16 %v398
      %v447 = vpack.c.b16 %v417, %v415
      %v448 = vpack.c.b16 %v418, %v416
      %v449 = vpack.c.b16 %v421, %v419
      %v450 = vpack.c.b16 %v422, %v420
      %v451 = vpack.c.b16 %v425, %v423
      %v452 = vpack.c.b16 %v426, %v424
      %v453 = vpack.c.b16 %v429, %v427
      %v454 = vpack.c.b16 %v430, %v428
      %v455 = vpack.c.b16 %v433, %v431
      %v456 = vpack.c.b16 %v434, %v432
      %v457 = vpack.c.b16 %v437, %v435
      %v458 = vpack.c.b16 %v438, %v436
      %v459 = vpack.c.b16 %v441, %v439
      %v460 = vpack.c.b16 %v442, %v440
      %v461 = vpack.c.b16 %v445, %v443
      %v462 = vpack.c.b16 %v446, %v444
      %479 = vmatprep.subr.bf16.mxu0 %v448
      %480 = vmatpush1.bf16.msra.mxu0 %v447
      %481 = vmatprep.subr.bf16.mxu0 %v450
      %482 = vmatpush1.bf16.msra.mxu0 %v449
      %483 = vmatprep.subr.bf16.mxu0 %v452
      %484 = vmatpush1.bf16.msra.mxu0 %v451
      %485 = vmatprep.subr.bf16.mxu0 %v454
      %486 = vmatpush1.bf16.msra.mxu0 %v453
      %487 = vmatprep.subr.bf16.mxu0 %v456
      %488 = vmatpush1.bf16.msra.mxu0 %v455
      %489 = vmatprep.subr.bf16.mxu0 %v458
      %490 = vmatpush1.bf16.msra.mxu0 %v457
      %491 = vmatprep.subr.bf16.mxu0 %v460
      %492 = vmatpush1.bf16.msra.mxu0 %v459
      %493 = vmatprep.subr.bf16.mxu0 %v462
      %494 = vmatpush1.bf16.msra.mxu0 %v461
      %495 = vmatprep.subr.bf16.mxu0 0
      %496 = vmatpush1.bf16.msra.mxu0 0
      %497 = vmatprep.subr.bf16.mxu0 0
      %498 = vmatpush1.bf16.msra.mxu0 0
      %499 = vmatprep.subr.bf16.mxu0 0
      %500 = vmatpush1.bf16.msra.mxu0 0
      %501 = vmatprep.subr.bf16.mxu0 0
      %502 = vmatpush1.bf16.msra.mxu0 0
      %503 = vmatprep.subr.bf16.mxu0 0
      %504 = vmatpush1.bf16.msra.mxu0 0
      %505 = vmatprep.subr.bf16.mxu0 0
      %506 = vmatpush1.bf16.msra.mxu0 0
      %507 = vmatprep.subr.bf16.mxu0 0
      %508 = vmatpush1.bf16.msra.mxu0 0
      %509 = vmatprep.subr.bf16.mxu0 0
      %510 = vmatpush1.bf16.msra.mxu0 0
      %511 = vmatprep.mubr.bf16.mxu0 0
      %512 = vmatmul.mubr.bf16.gmra.mrb[0].mxu0 %v320
      %v513 = vpop.f32.mrb[0].mxu0
      %v514 = vadd.f32 0.0, %v513
      %v515 = vpop.f32.mrb[0].mxu0
      %v516 = vadd.f32 0.0, %v515
      %v517 = vpop.f32.mrb[0].mxu0
      %v518 = vadd.f32 0.0, %v517
      %v519 = vpop.f32.mrb[0].mxu0
      %v520 = vadd.f32 0.0, %v519
      %521 = vmatprep.mubr.bf16.mxu0 0
      %522 = vmatmul.mubr.bf16.gmra.mrb[0].mxu0 %v321
      %v523 = vpop.f32.mrb[0].mxu0
      %v524 = vadd.f32 0.0, %v523
      %v525 = vpop.f32.mrb[0].mxu0
      %v526 = vadd.f32 0.0, %v525
      %v527 = vpop.f32.mrb[0].mxu0
      %v528 = vadd.f32 0.0, %v527
      %v529 = vpop.f32.mrb[0].mxu0
      %v530 = vadd.f32 0.0, %v529
      %531 = vdwg.mxu0
      %s532 = scalar_lea.vmem %s1, 128
      %v533 = vld [vmem:[%s532] sm:$0xff]
      %v534 = vld [vmem:[%s532 + $0x8] sm:$0xff]
      %v535 = vld [vmem:[%s532 + $0x10] sm:$0xff]
      %v536 = vld [vmem:[%s532 + $0x18] sm:$0xff]
      %v537 = vld [vmem:[%s532 + $0x20] sm:$0xff]
      %v538 = vld [vmem:[%s532 + $0x28] sm:$0xff]
      %v539 = vld [vmem:[%s532 + $0x30] sm:$0xff]
      %v540 = vld [vmem:[%s532 + $0x38] sm:$0xff]
      %v541 = vld [vmem:[%s532 + $0x40] sm:$0xff]
      %v542 = vld [vmem:[%s532 + $0x48] sm:$0xff]
      %v543 = vld [vmem:[%s532 + $0x50] sm:$0xff]
      %v544 = vld [vmem:[%s532 + $0x58] sm:$0xff]
      %v545 = vld [vmem:[%s532 + $0x60] sm:$0xff]
      %v546 = vld [vmem:[%s532 + $0x68] sm:$0xff]
      %v547 = vld [vmem:[%s532 + $0x70] sm:$0xff]
      %v548 = vld [vmem:[%s532 + $0x78] sm:$0xff]
      %v565 = vunpack.c.l.b16 %v533
      %v566 = vunpack.c.h.b16 %v533
      %v567 = vunpack.c.l.b16 %v534
      %v568 = vunpack.c.h.b16 %v534
      %v569 = vunpack.c.l.b16 %v535
      %v570 = vunpack.c.h.b16 %v535
      %v571 = vunpack.c.l.b16 %v536
      %v572 = vunpack.c.h.b16 %v536
      %v573 = vunpack.c.l.b16 %v537
      %v574 = vunpack.c.h.b16 %v537
      %v575 = vunpack.c.l.b16 %v538
      %v576 = vunpack.c.h.b16 %v538
      %v577 = vunpack.c.l.b16 %v539
      %v578 = vunpack.c.h.b16 %v539
      %v579 = vunpack.c.l.b16 %v540
      %v580 = vunpack.c.h.b16 %v540
      %v581 = vunpack.c.l.b16 %v541
      %v582 = vunpack.c.h.b16 %v541
      %v583 = vunpack.c.l.b16 %v542
      %v584 = vunpack.c.h.b16 %v542
      %v585 = vunpack.c.l.b16 %v543
      %v586 = vunpack.c.h.b16 %v543
      %v587 = vunpack.c.l.b16 %v544
      %v588 = vunpack.c.h.b16 %v544
      %v589 = vunpack.c.l.b16 %v545
      %v590 = vunpack.c.h.b16 %v545
      %v591 = vunpack.c.l.b16 %v546
      %v592 = vunpack.c.h.b16 %v546
      %v593 = vunpack.c.l.b16 %v547
      %v594 = vunpack.c.h.b16 %v547
      %v595 = vunpack.c.l.b16 %v548
      %v596 = vunpack.c.h.b16 %v548
      %v597 = vpack.c.b16 %v567, %v565
      %v598 = vpack.c.b16 %v568, %v566
      %v599 = vpack.c.b16 %v571, %v569
      %v600 = vpack.c.b16 %v572, %v570
      %v601 = vpack.c.b16 %v575, %v573
      %v602 = vpack.c.b16 %v576, %v574
      %v603 = vpack.c.b16 %v579, %v577
      %v604 = vpack.c.b16 %v580, %v578
      %v605 = vpack.c.b16 %v583, %v581
      %v606 = vpack.c.b16 %v584, %v582
      %v607 = vpack.c.b16 %v587, %v585
      %v608 = vpack.c.b16 %v588, %v586
      %v609 = vpack.c.b16 %v591, %v589
      %v610 = vpack.c.b16 %v592, %v590
      %v611 = vpack.c.b16 %v595, %v593
      %v612 = vpack.c.b16 %v596, %v594
      %629 = vmatprep.subr.bf16.mxu0 %v598
      %630 = vmatpush1.bf16.msra.mxu0 %v597
      %631 = vmatprep.subr.bf16.mxu0 %v600
      %632 = vmatpush1.bf16.msra.mxu0 %v599
      %633 = vmatprep.subr.bf16.mxu0 %v602
      %634 = vmatpush1.bf16.msra.mxu0 %v601
      %635 = vmatprep.subr.bf16.mxu0 %v604
      %636 = vmatpush1.bf16.msra.mxu0 %v603
      %637 = vmatprep.subr.bf16.mxu0 %v606
      %638 = vmatpush1.bf16.msra.mxu0 %v605
      %639 = vmatprep.subr.bf16.mxu0 %v608
      %640 = vmatpush1.bf16.msra.mxu0 %v607
      %641 = vmatprep.subr.bf16.mxu0 %v610
      %642 = vmatpush1.bf16.msra.mxu0 %v609
      %643 = vmatprep.subr.bf16.mxu0 %v612
      %644 = vmatpush1.bf16.msra.mxu0 %v611
      %645 = vmatprep.subr.bf16.mxu0 0
      %646 = vmatpush1.bf16.msra.mxu0 0
      %647 = vmatprep.subr.bf16.mxu0 0
      %648 = vmatpush1.bf16.msra.mxu0 0
      %649 = vmatprep.subr.bf16.mxu0 0
      %650 = vmatpush1.bf16.msra.mxu0 0
      %651 = vmatprep.subr.bf16.mxu0 0
      %652 = vmatpush1.bf16.msra.mxu0 0
      %653 = vmatprep.subr.bf16.mxu0 0
      %654 = vmatpush1.bf16.msra.mxu0 0
      %655 = vmatprep.subr.bf16.mxu0 0
      %656 = vmatpush1.bf16.msra.mxu0 0
      %657 = vmatprep.subr.bf16.mxu0 0
      %658 = vmatpush1.bf16.msra.mxu0 0
      %659 = vmatprep.subr.bf16.mxu0 0
      %660 = vmatpush1.bf16.msra.mxu0 0
      %661 = vmatprep.mubr.bf16.mxu0 0
      %662 = vmatmul.mubr.bf16.gmra.mrb[0].mxu0 %v320
      %v663 = vpop.f32.mrb[0].mxu0
      %v664 = vadd.f32 0.0, %v663
      %v665 = vpop.f32.mrb[0].mxu0
      %v666 = vadd.f32 0.0, %v665
      %v667 = vpop.f32.mrb[0].mxu0
      %v668 = vadd.f32 0.0, %v667
      %v669 = vpop.f32.mrb[0].mxu0
      %v670 = vadd.f32 0.0, %v669
      %671 = vmatprep.mubr.bf16.mxu0 0
      %672 = vmatmul.mubr.bf16.gmra.mrb[0].mxu0 %v321
      %v673 = vpop.f32.mrb[0].mxu0
      %v674 = vadd.f32 0.0, %v673
      %v675 = vpop.f32.mrb[0].mxu0
      %v676 = vadd.f32 0.0, %v675
      %v677 = vpop.f32.mrb[0].mxu0
      %v678 = vadd.f32 0.0, %v677
      %v679 = vpop.f32.mrb[0].mxu0
      %v680 = vadd.f32 0.0, %v679
      %681 = vdwg.mxu0
      %s682 = scalar_lea.vmem %s1, 256
      %v683 = vld [vmem:[%s682] sm:$0xff]
      %v684 = vld [vmem:[%s682 + $0x8] sm:$0xff]
      %v685 = vld [vmem:[%s682 + $0x10] sm:$0xff]
      %v686 = vld [vmem:[%s682 + $0x18] sm:$0xff]
      %v687 = vld [vmem:[%s682 + $0x20] sm:$0xff]
      %v688 = vld [vmem:[%s682 + $0x28] sm:$0xff]
      %v689 = vld [vmem:[%s682 + $0x30] sm:$0xff]
      %v690 = vld [vmem:[%s682 + $0x38] sm:$0xff]
      %v691 = vld [vmem:[%s682 + $0x40] sm:$0xff]
      %v692 = vld [vmem:[%s682 + $0x48] sm:$0xff]
      %v693 = vld [vmem:[%s682 + $0x50] sm:$0xff]
      %v694 = vld [vmem:[%s682 + $0x58] sm:$0xff]
      %v695 = vld [vmem:[%s682 + $0x60] sm:$0xff]
      %v696 = vld [vmem:[%s682 + $0x68] sm:$0xff]
      %v697 = vld [vmem:[%s682 + $0x70] sm:$0xff]
      %v698 = vld [vmem:[%s682 + $0x78] sm:$0xff]
      %v715 = vunpack.c.l.b16 %v683
      %v716 = vunpack.c.h.b16 %v683
      %v717 = vunpack.c.l.b16 %v684
      %v718 = vunpack.c.h.b16 %v684
      %v719 = vunpack.c.l.b16 %v685
      %v720 = vunpack.c.h.b16 %v685
      %v721 = vunpack.c.l.b16 %v686
      %v722 = vunpack.c.h.b16 %v686
      %v723 = vunpack.c.l.b16 %v687
      %v724 = vunpack.c.h.b16 %v687
      %v725 = vunpack.c.l.b16 %v688
      %v726 = vunpack.c.h.b16 %v688
      %v727 = vunpack.c.l.b16 %v689
      %v728 = vunpack.c.h.b16 %v689
      %v729 = vunpack.c.l.b16 %v690
      %v730 = vunpack.c.h.b16 %v690
      %v731 = vunpack.c.l.b16 %v691
      %v732 = vunpack.c.h.b16 %v691
      %v733 = vunpack.c.l.b16 %v692
      %v734 = vunpack.c.h.b16 %v692
      %v735 = vunpack.c.l.b16 %v693
      %v736 = vunpack.c.h.b16 %v693
      %v737 = vunpack.c.l.b16 %v694
      %v738 = vunpack.c.h.b16 %v694
      %v739 = vunpack.c.l.b16 %v695
      %v740 = vunpack.c.h.b16 %v695
      %v741 = vunpack.c.l.b16 %v696
      %v742 = vunpack.c.h.b16 %v696
      %v743 = vunpack.c.l.b16 %v697
      %v744 = vunpack.c.h.b16 %v697
      %v745 = vunpack.c.l.b16 %v698
      %v746 = vunpack.c.h.b16 %v698
      %v747 = vpack.c.b16 %v717, %v715
      %v748 = vpack.c.b16 %v718, %v716
      %v749 = vpack.c.b16 %v721, %v719
      %v750 = vpack.c.b16 %v722, %v720
      %v751 = vpack.c.b16 %v725, %v723
      %v752 = vpack.c.b16 %v726, %v724
      %v753 = vpack.c.b16 %v729, %v727
      %v754 = vpack.c.b16 %v730, %v728
      %v755 = vpack.c.b16 %v733, %v731
      %v756 = vpack.c.b16 %v734, %v732
      %v757 = vpack.c.b16 %v737, %v735
      %v758 = vpack.c.b16 %v738, %v736
      %v759 = vpack.c.b16 %v741, %v739
      %v760 = vpack.c.b16 %v742, %v740
      %v761 = vpack.c.b16 %v745, %v743
      %v762 = vpack.c.b16 %v746, %v744
      %779 = vmatprep.subr.bf16.mxu0 %v748
      %780 = vmatpush1.bf16.msra.mxu0 %v747
      %781 = vmatprep.subr.bf16.mxu0 %v750
      %782 = vmatpush1.bf16.msra.mxu0 %v749
      %783 = vmatprep.subr.bf16.mxu0 %v752
      %784 = vmatpush1.bf16.msra.mxu0 %v751
      %785 = vmatprep.subr.bf16.mxu0 %v754
      %786 = vmatpush1.bf16.msra.mxu0 %v753
      %787 = vmatprep.subr.bf16.mxu0 %v756
      %788 = vmatpush1.bf16.msra.mxu0 %v755
      %789 = vmatprep.subr.bf16.mxu0 %v758
      %790 = vmatpush1.bf16.msra.mxu0 %v757
      %791 = vmatprep.subr.bf16.mxu0 %v760
      %792 = vmatpush1.bf16.msra.mxu0 %v759
      %793 = vmatprep.subr.bf16.mxu0 %v762
      %794 = vmatpush1.bf16.msra.mxu0 %v761
      %795 = vmatprep.subr.bf16.mxu0 0
      %796 = vmatpush1.bf16.msra.mxu0 0
      %797 = vmatprep.subr.bf16.mxu0 0
      %798 = vmatpush1.bf16.msra.mxu0 0
      %799 = vmatprep.subr.bf16.mxu0 0
      %800 = vmatpush1.bf16.msra.mxu0 0
      %801 = vmatprep.subr.bf16.mxu0 0
      %802 = vmatpush1.bf16.msra.mxu0 0
      %803 = vmatprep.subr.bf16.mxu0 0
      %804 = vmatpush1.bf16.msra.mxu0 0
      %805 = vmatprep.subr.bf16.mxu0 0
      %806 = vmatpush1.bf16.msra.mxu0 0
      %807 = vmatprep.subr.bf16.mxu0 0
      %808 = vmatpush1.bf16.msra.mxu0 0
      %809 = vmatprep.subr.bf16.mxu0 0
      %810 = vmatpush1.bf16.msra.mxu0 0
      %811 = vmatprep.mubr.bf16.mxu0 0
      %812 = vmatmul.mubr.bf16.gmra.mrb[0].mxu0 %v320
      %v813 = vpop.f32.mrb[0].mxu0
      %v814 = vadd.f32 0.0, %v813
      %v815 = vpop.f32.mrb[0].mxu0
      %v816 = vadd.f32 0.0, %v815
      %v817 = vpop.f32.mrb[0].mxu0
      %v818 = vadd.f32 0.0, %v817
      %v819 = vpop.f32.mrb[0].mxu0
      %v820 = vadd.f32 0.0, %v819
      %821 = vmatprep.mubr.bf16.mxu0 0
      %822 = vmatmul.mubr.bf16.gmra.mrb[0].mxu0 %v321
      %v823 = vpop.f32.mrb[0].mxu0
      %v824 = vadd.f32 0.0, %v823
      %v825 = vpop.f32.mrb[0].mxu0
      %v826 = vadd.f32 0.0, %v825
      %v827 = vpop.f32.mrb[0].mxu0
      %v828 = vadd.f32 0.0, %v827
      %v829 = vpop.f32.mrb[0].mxu0
      %v830 = vadd.f32 0.0, %v829
      %831 = vdwg.mxu0
      %v832 = vrot.slane %v514, 7
      %v833 = vrot.slane %v516, 7
      %v834 = vrot.slane %v518, 7
      %v835 = vrot.slane %v520, 7
      %v836 = vrot.slane %v524, 7
      %v837 = vrot.slane %v526, 7
      %v838 = vrot.slane %v528, 7
      %v839 = vrot.slane %v530, 7
      %vm840 = vcmp.lt.s32.totalorder %v323, 1
      %v841 = vsel %vm840, %v836, %v838
      %v842 = vsel %vm840, %v837, %v839
      %v843 = vsel %vm840, %v834, %v836
      %v844 = vsel %vm840, %v835, %v837
      %v845 = vsel %vm840, %v832, %v834
      %v846 = vsel %vm840, %v833, %v835
      %v847 = vsel %vm840, %v838, %v832
      %v848 = vsel %vm840, %v839, %v833
      %v849 = vsel %vm375, 1, 0
      %v850 = vsel %vm376, 1, 0
      %v851 = vsel %vm377, 1, 0
      %v852 = vsel %vm378, 1, 0
      %vm853 = vcmp.eq.s32.totalorder %v849, 1
      %vm854 = vcmp.eq.s32.totalorder %v850, 1
      %vm855 = vcmp.eq.s32.totalorder %v851, 1
      %vm856 = vcmp.eq.s32.totalorder %v852, 1
      %v857 = vsel %vm853, %v847, 0.0
      %v858 = vsel %vm853, %v848, 0.0
      %v859 = vsel %vm854, %v845, 0.0
      %v860 = vsel %vm854, %v846, 0.0
      %v861 = vsel %vm855, %v843, 0.0
      %v862 = vsel %vm855, %v844, 0.0
      %v863 = vsel %vm856, %v841, 0.0
      %v864 = vsel %vm856, %v842, 0.0
      %v865 = vrot.slane %v814, 1
      %v866 = vrot.slane %v816, 1
      %v867 = vrot.slane %v818, 1
      %v868 = vrot.slane %v820, 1
      %v869 = vrot.slane %v824, 1
      %v870 = vrot.slane %v826, 1
      %v871 = vrot.slane %v828, 1
      %v872 = vrot.slane %v830, 1
      %vm873 = vcmp.lt.s32.totalorder %v323, 7
      %v874 = vsel %vm873, %v869, %v871
      %v875 = vsel %vm873, %v870, %v872
      %v876 = vsel %vm873, %v867, %v869
      %v877 = vsel %vm873, %v868, %v870
      %v878 = vsel %vm873, %v865, %v867
      %v879 = vsel %vm873, %v866, %v868
      %v880 = vsel %vm873, %v871, %v865
      %v881 = vsel %vm873, %v872, %v866
      %v882 = vsel %vm379, 1, 0
      %v883 = vsel %vm380, 1, 0
      %v884 = vsel %vm381, 1, 0
      %v885 = vsel %vm382, 1, 0
      %vm886 = vcmp.eq.s32.totalorder %v882, 1
      %vm887 = vcmp.eq.s32.totalorder %v883, 1
      %vm888 = vcmp.eq.s32.totalorder %v884, 1
      %vm889 = vcmp.eq.s32.totalorder %v885, 1
      %v890 = vsel %vm886, %v878, 0.0
      %v891 = vsel %vm886, %v879, 0.0
      %v892 = vsel %vm887, %v876, 0.0
      %v893 = vsel %vm887, %v877, 0.0
      %v894 = vsel %vm888, %v874, 0.0
      %v895 = vsel %vm888, %v875, 0.0
      %v896 = vsel %vm889, %v880, 0.0
      %v897 = vsel %vm889, %v881, 0.0
      %v898 = vadd.f32 %v857, %v664
      %v899 = vadd.f32 %v858, %v666
      %v900 = vadd.f32 %v859, %v668
      %v901 = vadd.f32 %v860, %v670
      %v902 = vadd.f32 %v861, %v674
      %v903 = vadd.f32 %v862, %v676
      %v904 = vadd.f32 %v863, %v678
      %v905 = vadd.f32 %v864, %v680
      %v906 = vadd.f32 %v898, %v890
      %v907 = vadd.f32 %v899, %v891
      %v908 = vadd.f32 %v900, %v892
      %v909 = vadd.f32 %v901, %v893
      %v910 = vadd.f32 %v902, %v894
      %v911 = vadd.f32 %v903, %v895
      %v912 = vadd.f32 %v904, %v896
      %v913 = vadd.f32 %v905, %v897
      %v914 = vld [vmem:[%s2] sm:$0x3]
      %v916 = vlaneseq
      %v917 = vshrl.u32 %v916, 7
      %v918 = vsub.s32 0, %v917
      %v919 = vrot.slane %v914, %v918
      %v920 = vlaneseq
      %v921 = vshrl.u32 %v920, 7
      %v922 = vsub.s32 1, %v921
      %v923 = vrot.slane %v914, %v922
      %v926 = vadd.f32 %v906, %v919
      %v927 = vadd.f32 %v907, %v923
      %v928 = vadd.f32 %v908, %v919
      %v929 = vadd.f32 %v909, %v923
      %v930 = vadd.f32 %v910, %v919
      %v931 = vadd.f32 %v911, %v923
      %v932 = vadd.f32 %v912, %v919
      %v933 = vadd.f32 %v913, %v923
      %vm934 = vcmp.ge.f32.partialorder %v926, 0.0
      %vm935 = vcmp.ge.f32.partialorder %v927, 0.0
      %vm936 = vcmp.ge.f32.partialorder %v928, 0.0
      %vm937 = vcmp.ge.f32.partialorder %v929, 0.0
      %vm938 = vcmp.ge.f32.partialorder %v930, 0.0
      %vm939 = vcmp.ge.f32.partialorder %v931, 0.0
      %vm940 = vcmp.ge.f32.partialorder %v932, 0.0
      %vm941 = vcmp.ge.f32.partialorder %v933, 0.0
      %v942 = vmul.f32 %v926, 0.2
      %v943 = vmul.f32 %v927, 0.2
      %v944 = vmul.f32 %v928, 0.2
      %v945 = vmul.f32 %v929, 0.2
      %v946 = vmul.f32 %v930, 0.2
      %v947 = vmul.f32 %v931, 0.2
      %v948 = vmul.f32 %v932, 0.2
      %v949 = vmul.f32 %v933, 0.2
      %v950 = vsel %vm934, %v926, %v942
      %v951 = vsel %vm935, %v927, %v943
      %v952 = vsel %vm936, %v928, %v944
      %v953 = vsel %vm937, %v929, %v945
      %v954 = vsel %vm938, %v930, %v946
      %v955 = vsel %vm939, %v931, %v947
      %v956 = vsel %vm940, %v932, %v948
      %v957 = vsel %vm941, %v933, %v949
      %v958 = vpack.c.bf16 %v952, %v950
      %v959 = vpack.c.bf16 %v953, %v951
      %v960 = vpack.c.bf16 %v956, %v954
      %v961 = vpack.c.bf16 %v957, %v955
      %v962 = vld [vmem:[%s3] sm:$0xf]
      %v963 = vld [vmem:[%s3 + $0x4] sm:$0xf]
      %v964 = vld [vmem:[%s3 + $0x8] sm:$0xf]
      %v965 = vld [vmem:[%s3 + $0xc] sm:$0xf]
      %v966 = vld [vmem:[%s3 + $0x10] sm:$0xf]
      %v967 = vld [vmem:[%s3 + $0x14] sm:$0xf]
      %v968 = vld [vmem:[%s3 + $0x18] sm:$0xf]
      %v969 = vld [vmem:[%s3 + $0x1c] sm:$0xf]
      %v970 = vld [vmem:[%s3 + $0x20] sm:$0xf]
      %v971 = vld [vmem:[%s3 + $0x24] sm:$0xf]
      %v972 = vld [vmem:[%s3 + $0x28] sm:$0xf]
      %v973 = vld [vmem:[%s3 + $0x2c] sm:$0xf]
      %v974 = vld [vmem:[%s3 + $0x30] sm:$0xf]
      %v975 = vld [vmem:[%s3 + $0x34] sm:$0xf]
      %v976 = vld [vmem:[%s3 + $0x38] sm:$0xf]
      %v977 = vld [vmem:[%s3 + $0x3c] sm:$0xf]
      %v978 = vld [vmem:[%s3 + $0x40] sm:$0xf]
      %v979 = vld [vmem:[%s3 + $0x44] sm:$0xf]
      %v980 = vld [vmem:[%s3 + $0x48] sm:$0xf]
      %v981 = vld [vmem:[%s3 + $0x4c] sm:$0xf]
      %v982 = vld [vmem:[%s3 + $0x50] sm:$0xf]
      %v983 = vld [vmem:[%s3 + $0x54] sm:$0xf]
      %v984 = vld [vmem:[%s3 + $0x58] sm:$0xf]
      %v985 = vld [vmem:[%s3 + $0x5c] sm:$0xf]
      %v986 = vld [vmem:[%s3 + $0x60] sm:$0xf]
      %v987 = vld [vmem:[%s3 + $0x64] sm:$0xf]
      %v988 = vld [vmem:[%s3 + $0x68] sm:$0xf]
      %v989 = vld [vmem:[%s3 + $0x6c] sm:$0xf]
      %v990 = vld [vmem:[%s3 + $0x70] sm:$0xf]
      %v991 = vld [vmem:[%s3 + $0x74] sm:$0xf]
      %v992 = vld [vmem:[%s3 + $0x78] sm:$0xf]
      %v993 = vld [vmem:[%s3 + $0x7c] sm:$0xf]
      %v1026 = vunpack.c.l.b16 %v962
      %v1027 = vunpack.c.l.b16 %v963
      %v1028 = vunpack.c.l.b16 %v964
      %v1029 = vunpack.c.l.b16 %v965
      %v1030 = vunpack.c.l.b16 %v966
      %v1031 = vunpack.c.l.b16 %v967
      %v1032 = vunpack.c.l.b16 %v968
      %v1033 = vunpack.c.l.b16 %v969
      %v1034 = vunpack.c.l.b16 %v970
      %v1035 = vunpack.c.l.b16 %v971
      %v1036 = vunpack.c.l.b16 %v972
      %v1037 = vunpack.c.l.b16 %v973
      %v1038 = vunpack.c.l.b16 %v974
      %v1039 = vunpack.c.l.b16 %v975
      %v1040 = vunpack.c.l.b16 %v976
      %v1041 = vunpack.c.l.b16 %v977
      %v1042 = vunpack.c.l.b16 %v978
      %v1043 = vunpack.c.l.b16 %v979
      %v1044 = vunpack.c.l.b16 %v980
      %v1045 = vunpack.c.l.b16 %v981
      %v1046 = vunpack.c.l.b16 %v982
      %v1047 = vunpack.c.l.b16 %v983
      %v1048 = vunpack.c.l.b16 %v984
      %v1049 = vunpack.c.l.b16 %v985
      %v1050 = vunpack.c.l.b16 %v986
      %v1051 = vunpack.c.l.b16 %v987
      %v1052 = vunpack.c.l.b16 %v988
      %v1053 = vunpack.c.l.b16 %v989
      %v1054 = vunpack.c.l.b16 %v990
      %v1055 = vunpack.c.l.b16 %v991
      %v1056 = vunpack.c.l.b16 %v992
      %v1057 = vunpack.c.l.b16 %v993
      %v1058 = vpack.c.b16 %v1027, %v1026
      %v1059 = vpack.c.b16 %v1029, %v1028
      %v1060 = vpack.c.b16 %v1031, %v1030
      %v1061 = vpack.c.b16 %v1033, %v1032
      %v1062 = vpack.c.b16 %v1035, %v1034
      %v1063 = vpack.c.b16 %v1037, %v1036
      %v1064 = vpack.c.b16 %v1039, %v1038
      %v1065 = vpack.c.b16 %v1041, %v1040
      %v1066 = vpack.c.b16 %v1043, %v1042
      %v1067 = vpack.c.b16 %v1045, %v1044
      %v1068 = vpack.c.b16 %v1047, %v1046
      %v1069 = vpack.c.b16 %v1049, %v1048
      %v1070 = vpack.c.b16 %v1051, %v1050
      %v1071 = vpack.c.b16 %v1053, %v1052
      %v1072 = vpack.c.b16 %v1055, %v1054
      %v1073 = vpack.c.b16 %v1057, %v1056
      %1090 = vmatprep.subr.bf16.mxu0 0
      %1091 = vmatpush1.bf16.msra.mxu0 %v1058
      %1092 = vmatprep.subr.bf16.mxu0 0
      %1093 = vmatpush1.bf16.msra.mxu0 %v1059
      %1094 = vmatprep.subr.bf16.mxu0 0
      %1095 = vmatpush1.bf16.msra.mxu0 %v1060
      %1096 = vmatprep.subr.bf16.mxu0 0
      %1097 = vmatpush1.bf16.msra.mxu0 %v1061
      %1098 = vmatprep.subr.bf16.mxu0 0
      %1099 = vmatpush1.bf16.msra.mxu0 %v1062
      %1100 = vmatprep.subr.bf16.mxu0 0
      %1101 = vmatpush1.bf16.msra.mxu0 %v1063
      %1102 = vmatprep.subr.bf16.mxu0 0
      %1103 = vmatpush1.bf16.msra.mxu0 %v1064
      %1104 = vmatprep.subr.bf16.mxu0 0
      %1105 = vmatpush1.bf16.msra.mxu0 %v1065
      %1106 = vmatprep.subr.bf16.mxu0 0
      %1107 = vmatpush1.bf16.msra.mxu0 %v1066
      %1108 = vmatprep.subr.bf16.mxu0 0
      %1109 = vmatpush1.bf16.msra.mxu0 %v1067
      %1110 = vmatprep.subr.bf16.mxu0 0
      %1111 = vmatpush1.bf16.msra.mxu0 %v1068
      %1112 = vmatprep.subr.bf16.mxu0 0
      %1113 = vmatpush1.bf16.msra.mxu0 %v1069
      %1114 = vmatprep.subr.bf16.mxu0 0
      %1115 = vmatpush1.bf16.msra.mxu0 %v1070
      %1116 = vmatprep.subr.bf16.mxu0 0
      %1117 = vmatpush1.bf16.msra.mxu0 %v1071
      %1118 = vmatprep.subr.bf16.mxu0 0
      %1119 = vmatpush1.bf16.msra.mxu0 %v1072
      %1120 = vmatprep.subr.bf16.mxu0 0
      %1121 = vmatpush1.bf16.msra.mxu0 %v1073
      %1122 = vmatprep.mubr.bf16.mxu0 %v959
      %1123 = vmatmul.mubr.bf16.gmra.mrb[0].mxu0 %v958
      %v1124 = vpop.f32.mrb[0].mxu0
      %v1125 = vadd.f32 0.0, %v1124
      %v1126 = vpop.f32.mrb[0].mxu0
      %v1127 = vpop.f32.mrb[0].mxu0
      %v1128 = vadd.f32 0.0, %v1127
      %v1129 = vpop.f32.mrb[0].mxu0
      %1130 = vmatprep.mubr.bf16.mxu0 %v961
      %1131 = vmatmul.mubr.bf16.gmra.mrb[0].mxu0 %v960
      %v1132 = vpop.f32.mrb[0].mxu0
      %v1133 = vadd.f32 0.0, %v1132
      %v1134 = vpop.f32.mrb[0].mxu0
      %v1135 = vpop.f32.mrb[0].mxu0
      %v1136 = vadd.f32 0.0, %v1135
      %v1137 = vpop.f32.mrb[0].mxu0
      %1138 = vdwg.mxu0
      %s1139 = scalar_lea.vmem %s3, 128
      %v1140 = vld [vmem:[%s1139] sm:$0xf]
      %v1141 = vld [vmem:[%s1139 + $0x4] sm:$0xf]
      %v1142 = vld [vmem:[%s1139 + $0x8] sm:$0xf]
      %v1143 = vld [vmem:[%s1139 + $0xc] sm:$0xf]
      %v1144 = vld [vmem:[%s1139 + $0x10] sm:$0xf]
      %v1145 = vld [vmem:[%s1139 + $0x14] sm:$0xf]
      %v1146 = vld [vmem:[%s1139 + $0x18] sm:$0xf]
      %v1147 = vld [vmem:[%s1139 + $0x1c] sm:$0xf]
      %v1148 = vld [vmem:[%s1139 + $0x20] sm:$0xf]
      %v1149 = vld [vmem:[%s1139 + $0x24] sm:$0xf]
      %v1150 = vld [vmem:[%s1139 + $0x28] sm:$0xf]
      %v1151 = vld [vmem:[%s1139 + $0x2c] sm:$0xf]
      %v1152 = vld [vmem:[%s1139 + $0x30] sm:$0xf]
      %v1153 = vld [vmem:[%s1139 + $0x34] sm:$0xf]
      %v1154 = vld [vmem:[%s1139 + $0x38] sm:$0xf]
      %v1155 = vld [vmem:[%s1139 + $0x3c] sm:$0xf]
      %v1156 = vld [vmem:[%s1139 + $0x40] sm:$0xf]
      %v1157 = vld [vmem:[%s1139 + $0x44] sm:$0xf]
      %v1158 = vld [vmem:[%s1139 + $0x48] sm:$0xf]
      %v1159 = vld [vmem:[%s1139 + $0x4c] sm:$0xf]
      %v1160 = vld [vmem:[%s1139 + $0x50] sm:$0xf]
      %v1161 = vld [vmem:[%s1139 + $0x54] sm:$0xf]
      %v1162 = vld [vmem:[%s1139 + $0x58] sm:$0xf]
      %v1163 = vld [vmem:[%s1139 + $0x5c] sm:$0xf]
      %v1164 = vld [vmem:[%s1139 + $0x60] sm:$0xf]
      %v1165 = vld [vmem:[%s1139 + $0x64] sm:$0xf]
      %v1166 = vld [vmem:[%s1139 + $0x68] sm:$0xf]
      %v1167 = vld [vmem:[%s1139 + $0x6c] sm:$0xf]
      %v1168 = vld [vmem:[%s1139 + $0x70] sm:$0xf]
      %v1169 = vld [vmem:[%s1139 + $0x74] sm:$0xf]
      %v1170 = vld [vmem:[%s1139 + $0x78] sm:$0xf]
      %v1171 = vld [vmem:[%s1139 + $0x7c] sm:$0xf]
      %v1204 = vunpack.c.l.b16 %v1140
      %v1205 = vunpack.c.l.b16 %v1141
      %v1206 = vunpack.c.l.b16 %v1142
      %v1207 = vunpack.c.l.b16 %v1143
      %v1208 = vunpack.c.l.b16 %v1144
      %v1209 = vunpack.c.l.b16 %v1145
      %v1210 = vunpack.c.l.b16 %v1146
      %v1211 = vunpack.c.l.b16 %v1147
      %v1212 = vunpack.c.l.b16 %v1148
      %v1213 = vunpack.c.l.b16 %v1149
      %v1214 = vunpack.c.l.b16 %v1150
      %v1215 = vunpack.c.l.b16 %v1151
      %v1216 = vunpack.c.l.b16 %v1152
      %v1217 = vunpack.c.l.b16 %v1153
      %v1218 = vunpack.c.l.b16 %v1154
      %v1219 = vunpack.c.l.b16 %v1155
      %v1220 = vunpack.c.l.b16 %v1156
      %v1221 = vunpack.c.l.b16 %v1157
      %v1222 = vunpack.c.l.b16 %v1158
      %v1223 = vunpack.c.l.b16 %v1159
      %v1224 = vunpack.c.l.b16 %v1160
      %v1225 = vunpack.c.l.b16 %v1161
      %v1226 = vunpack.c.l.b16 %v1162
      %v1227 = vunpack.c.l.b16 %v1163
      %v1228 = vunpack.c.l.b16 %v1164
      %v1229 = vunpack.c.l.b16 %v1165
      %v1230 = vunpack.c.l.b16 %v1166
      %v1231 = vunpack.c.l.b16 %v1167
      %v1232 = vunpack.c.l.b16 %v1168
      %v1233 = vunpack.c.l.b16 %v1169
      %v1234 = vunpack.c.l.b16 %v1170
      %v1235 = vunpack.c.l.b16 %v1171
      %v1236 = vpack.c.b16 %v1205, %v1204
      %v1237 = vpack.c.b16 %v1207, %v1206
      %v1238 = vpack.c.b16 %v1209, %v1208
      %v1239 = vpack.c.b16 %v1211, %v1210
      %v1240 = vpack.c.b16 %v1213, %v1212
      %v1241 = vpack.c.b16 %v1215, %v1214
      %v1242 = vpack.c.b16 %v1217, %v1216
      %v1243 = vpack.c.b16 %v1219, %v1218
      %v1244 = vpack.c.b16 %v1221, %v1220
      %v1245 = vpack.c.b16 %v1223, %v1222
      %v1246 = vpack.c.b16 %v1225, %v1224
      %v1247 = vpack.c.b16 %v1227, %v1226
      %v1248 = vpack.c.b16 %v1229, %v1228
      %v1249 = vpack.c.b16 %v1231, %v1230
      %v1250 = vpack.c.b16 %v1233, %v1232
      %v1251 = vpack.c.b16 %v1235, %v1234
      %1268 = vmatprep.subr.bf16.mxu0 0
      %1269 = vmatpush1.bf16.msra.mxu0 %v1236
      %1270 = vmatprep.subr.bf16.mxu0 0
      %1271 = vmatpush1.bf16.msra.mxu0 %v1237
      %1272 = vmatprep.subr.bf16.mxu0 0
      %1273 = vmatpush1.bf16.msra.mxu0 %v1238
      %1274 = vmatprep.subr.bf16.mxu0 0
      %1275 = vmatpush1.bf16.msra.mxu0 %v1239
      %1276 = vmatprep.subr.bf16.mxu0 0
      %1277 = vmatpush1.bf16.msra.mxu0 %v1240
      %1278 = vmatprep.subr.bf16.mxu0 0
      %1279 = vmatpush1.bf16.msra.mxu0 %v1241
      %1280 = vmatprep.subr.bf16.mxu0 0
      %1281 = vmatpush1.bf16.msra.mxu0 %v1242
      %1282 = vmatprep.subr.bf16.mxu0 0
      %1283 = vmatpush1.bf16.msra.mxu0 %v1243
      %1284 = vmatprep.subr.bf16.mxu0 0
      %1285 = vmatpush1.bf16.msra.mxu0 %v1244
      %1286 = vmatprep.subr.bf16.mxu0 0
      %1287 = vmatpush1.bf16.msra.mxu0 %v1245
      %1288 = vmatprep.subr.bf16.mxu0 0
      %1289 = vmatpush1.bf16.msra.mxu0 %v1246
      %1290 = vmatprep.subr.bf16.mxu0 0
      %1291 = vmatpush1.bf16.msra.mxu0 %v1247
      %1292 = vmatprep.subr.bf16.mxu0 0
      %1293 = vmatpush1.bf16.msra.mxu0 %v1248
      %1294 = vmatprep.subr.bf16.mxu0 0
      %1295 = vmatpush1.bf16.msra.mxu0 %v1249
      %1296 = vmatprep.subr.bf16.mxu0 0
      %1297 = vmatpush1.bf16.msra.mxu0 %v1250
      %1298 = vmatprep.subr.bf16.mxu0 0
      %1299 = vmatpush1.bf16.msra.mxu0 %v1251
      %1300 = vmatprep.mubr.bf16.mxu0 %v959
      %1301 = vmatmul.mubr.bf16.gmra.mrb[0].mxu0 %v958
      %v1302 = vpop.f32.mrb[0].mxu0
      %v1303 = vadd.f32 0.0, %v1302
      %v1304 = vpop.f32.mrb[0].mxu0
      %v1305 = vpop.f32.mrb[0].mxu0
      %v1306 = vadd.f32 0.0, %v1305
      %v1307 = vpop.f32.mrb[0].mxu0
      %1308 = vmatprep.mubr.bf16.mxu0 %v961
      %1309 = vmatmul.mubr.bf16.gmra.mrb[0].mxu0 %v960
      %v1310 = vpop.f32.mrb[0].mxu0
      %v1311 = vadd.f32 0.0, %v1310
      %v1312 = vpop.f32.mrb[0].mxu0
      %v1313 = vpop.f32.mrb[0].mxu0
      %v1314 = vadd.f32 0.0, %v1313
      %v1315 = vpop.f32.mrb[0].mxu0
      %1316 = vdwg.mxu0
      %s1317 = scalar_lea.vmem %s3, 256
      %v1318 = vld [vmem:[%s1317] sm:$0xf]
      %v1319 = vld [vmem:[%s1317 + $0x4] sm:$0xf]
      %v1320 = vld [vmem:[%s1317 + $0x8] sm:$0xf]
      %v1321 = vld [vmem:[%s1317 + $0xc] sm:$0xf]
      %v1322 = vld [vmem:[%s1317 + $0x10] sm:$0xf]
      %v1323 = vld [vmem:[%s1317 + $0x14] sm:$0xf]
      %v1324 = vld [vmem:[%s1317 + $0x18] sm:$0xf]
      %v1325 = vld [vmem:[%s1317 + $0x1c] sm:$0xf]
      %v1326 = vld [vmem:[%s1317 + $0x20] sm:$0xf]
      %v1327 = vld [vmem:[%s1317 + $0x24] sm:$0xf]
      %v1328 = vld [vmem:[%s1317 + $0x28] sm:$0xf]
      %v1329 = vld [vmem:[%s1317 + $0x2c] sm:$0xf]
      %v1330 = vld [vmem:[%s1317 + $0x30] sm:$0xf]
      %v1331 = vld [vmem:[%s1317 + $0x34] sm:$0xf]
      %v1332 = vld [vmem:[%s1317 + $0x38] sm:$0xf]
      %v1333 = vld [vmem:[%s1317 + $0x3c] sm:$0xf]
      %v1334 = vld [vmem:[%s1317 + $0x40] sm:$0xf]
      %v1335 = vld [vmem:[%s1317 + $0x44] sm:$0xf]
      %v1336 = vld [vmem:[%s1317 + $0x48] sm:$0xf]
      %v1337 = vld [vmem:[%s1317 + $0x4c] sm:$0xf]
      %v1338 = vld [vmem:[%s1317 + $0x50] sm:$0xf]
      %v1339 = vld [vmem:[%s1317 + $0x54] sm:$0xf]
      %v1340 = vld [vmem:[%s1317 + $0x58] sm:$0xf]
      %v1341 = vld [vmem:[%s1317 + $0x5c] sm:$0xf]
      %v1342 = vld [vmem:[%s1317 + $0x60] sm:$0xf]
      %v1343 = vld [vmem:[%s1317 + $0x64] sm:$0xf]
      %v1344 = vld [vmem:[%s1317 + $0x68] sm:$0xf]
      %v1345 = vld [vmem:[%s1317 + $0x6c] sm:$0xf]
      %v1346 = vld [vmem:[%s1317 + $0x70] sm:$0xf]
      %v1347 = vld [vmem:[%s1317 + $0x74] sm:$0xf]
      %v1348 = vld [vmem:[%s1317 + $0x78] sm:$0xf]
      %v1349 = vld [vmem:[%s1317 + $0x7c] sm:$0xf]
      %v1382 = vunpack.c.l.b16 %v1318
      %v1383 = vunpack.c.l.b16 %v1319
      %v1384 = vunpack.c.l.b16 %v1320
      %v1385 = vunpack.c.l.b16 %v1321
      %v1386 = vunpack.c.l.b16 %v1322
      %v1387 = vunpack.c.l.b16 %v1323
      %v1388 = vunpack.c.l.b16 %v1324
      %v1389 = vunpack.c.l.b16 %v1325
      %v1390 = vunpack.c.l.b16 %v1326
      %v1391 = vunpack.c.l.b16 %v1327
      %v1392 = vunpack.c.l.b16 %v1328
      %v1393 = vunpack.c.l.b16 %v1329
      %v1394 = vunpack.c.l.b16 %v1330
      %v1395 = vunpack.c.l.b16 %v1331
      %v1396 = vunpack.c.l.b16 %v1332
      %v1397 = vunpack.c.l.b16 %v1333
      %v1398 = vunpack.c.l.b16 %v1334
      %v1399 = vunpack.c.l.b16 %v1335
      %v1400 = vunpack.c.l.b16 %v1336
      %v1401 = vunpack.c.l.b16 %v1337
      %v1402 = vunpack.c.l.b16 %v1338
      %v1403 = vunpack.c.l.b16 %v1339
      %v1404 = vunpack.c.l.b16 %v1340
      %v1405 = vunpack.c.l.b16 %v1341
      %v1406 = vunpack.c.l.b16 %v1342
      %v1407 = vunpack.c.l.b16 %v1343
      %v1408 = vunpack.c.l.b16 %v1344
      %v1409 = vunpack.c.l.b16 %v1345
      %v1410 = vunpack.c.l.b16 %v1346
      %v1411 = vunpack.c.l.b16 %v1347
      %v1412 = vunpack.c.l.b16 %v1348
      %v1413 = vunpack.c.l.b16 %v1349
      %v1414 = vpack.c.b16 %v1383, %v1382
      %v1415 = vpack.c.b16 %v1385, %v1384
      %v1416 = vpack.c.b16 %v1387, %v1386
      %v1417 = vpack.c.b16 %v1389, %v1388
      %v1418 = vpack.c.b16 %v1391, %v1390
      %v1419 = vpack.c.b16 %v1393, %v1392
      %v1420 = vpack.c.b16 %v1395, %v1394
      %v1421 = vpack.c.b16 %v1397, %v1396
      %v1422 = vpack.c.b16 %v1399, %v1398
      %v1423 = vpack.c.b16 %v1401, %v1400
      %v1424 = vpack.c.b16 %v1403, %v1402
      %v1425 = vpack.c.b16 %v1405, %v1404
      %v1426 = vpack.c.b16 %v1407, %v1406
      %v1427 = vpack.c.b16 %v1409, %v1408
      %v1428 = vpack.c.b16 %v1411, %v1410
      %v1429 = vpack.c.b16 %v1413, %v1412
      %1446 = vmatprep.subr.bf16.mxu0 0
      %1447 = vmatpush1.bf16.msra.mxu0 %v1414
      %1448 = vmatprep.subr.bf16.mxu0 0
      %1449 = vmatpush1.bf16.msra.mxu0 %v1415
      %1450 = vmatprep.subr.bf16.mxu0 0
      %1451 = vmatpush1.bf16.msra.mxu0 %v1416
      %1452 = vmatprep.subr.bf16.mxu0 0
      %1453 = vmatpush1.bf16.msra.mxu0 %v1417
      %1454 = vmatprep.subr.bf16.mxu0 0
      %1455 = vmatpush1.bf16.msra.mxu0 %v1418
      %1456 = vmatprep.subr.bf16.mxu0 0
      %1457 = vmatpush1.bf16.msra.mxu0 %v1419
      %1458 = vmatprep.subr.bf16.mxu0 0
      %1459 = vmatpush1.bf16.msra.mxu0 %v1420
      %1460 = vmatprep.subr.bf16.mxu0 0
      %1461 = vmatpush1.bf16.msra.mxu0 %v1421
      %1462 = vmatprep.subr.bf16.mxu0 0
      %1463 = vmatpush1.bf16.msra.mxu0 %v1422
      %1464 = vmatprep.subr.bf16.mxu0 0
      %1465 = vmatpush1.bf16.msra.mxu0 %v1423
      %1466 = vmatprep.subr.bf16.mxu0 0
      %1467 = vmatpush1.bf16.msra.mxu0 %v1424
      %1468 = vmatprep.subr.bf16.mxu0 0
      %1469 = vmatpush1.bf16.msra.mxu0 %v1425
      %1470 = vmatprep.subr.bf16.mxu0 0
      %1471 = vmatpush1.bf16.msra.mxu0 %v1426
      %1472 = vmatprep.subr.bf16.mxu0 0
      %1473 = vmatpush1.bf16.msra.mxu0 %v1427
      %1474 = vmatprep.subr.bf16.mxu0 0
      %1475 = vmatpush1.bf16.msra.mxu0 %v1428
      %1476 = vmatprep.subr.bf16.mxu0 0
      %1477 = vmatpush1.bf16.msra.mxu0 %v1429
      %1478 = vmatprep.mubr.bf16.mxu0 %v959
      %1479 = vmatmul.mubr.bf16.gmra.mrb[0].mxu0 %v958
      %v1480 = vpop.f32.mrb[0].mxu0
      %v1481 = vadd.f32 0.0, %v1480
      %v1482 = vpop.f32.mrb[0].mxu0
      %v1483 = vpop.f32.mrb[0].mxu0
      %v1484 = vadd.f32 0.0, %v1483
      %v1485 = vpop.f32.mrb[0].mxu0
      %1486 = vmatprep.mubr.bf16.mxu0 %v961
      %1487 = vmatmul.mubr.bf16.gmra.mrb[0].mxu0 %v960
      %v1488 = vpop.f32.mrb[0].mxu0
      %v1489 = vadd.f32 0.0, %v1488
      %v1490 = vpop.f32.mrb[0].mxu0
      %v1491 = vpop.f32.mrb[0].mxu0
      %v1492 = vadd.f32 0.0, %v1491
      %v1493 = vpop.f32.mrb[0].mxu0
      %1494 = vdwg.mxu0
      %v1495 = vrot.slane %v1125, 7
      %v1496 = vrot.slane %v1128, 7
      %v1497 = vrot.slane %v1133, 7
      %v1498 = vrot.slane %v1136, 7
      %v1499 = vsel %vm840, %v1497, %v1498
      %v1500 = vsel %vm840, %v1496, %v1497
      %v1501 = vsel %vm840, %v1495, %v1496
      %v1502 = vsel %vm840, %v1498, %v1495
      %v1503 = vsel %vm853, %v1502, 0.0
      %v1504 = vsel %vm854, %v1501, 0.0
      %v1505 = vsel %vm855, %v1500, 0.0
      %v1506 = vsel %vm856, %v1499, 0.0
      %v1507 = vrot.slane %v1481, 1
      %v1508 = vrot.slane %v1484, 1
      %v1509 = vrot.slane %v1489, 1
      %v1510 = vrot.slane %v1492, 1
      %v1511 = vsel %vm873, %v1509, %v1510
      %v1512 = vsel %vm873, %v1508, %v1509
      %v1513 = vsel %vm873, %v1507, %v1508
      %v1514 = vsel %vm873, %v1510, %v1507
      %v1515 = vsel %vm886, %v1513, 0.0
      %v1516 = vsel %vm887, %v1512, 0.0
      %v1517 = vsel %vm888, %v1511, 0.0
      %v1518 = vsel %vm889, %v1514, 0.0
      %v1519 = vadd.f32 %v1503, %v1303
      %v1520 = vadd.f32 %v1504, %v1306
      %v1521 = vadd.f32 %v1505, %v1311
      %v1522 = vadd.f32 %v1506, %v1314
      %v1523 = vadd.f32 %v1519, %v1515
      %v1524 = vadd.f32 %v1520, %v1516
      %v1525 = vadd.f32 %v1521, %v1517
      %v1526 = vadd.f32 %v1522, %v1518
      %v1527 = vld [vmem:[%s4] sm:$0x1]
      %v1529 = vlaneseq
      %v1530 = vshrl.u32 %v1529, 7
      %v1531 = vsub.s32 0, %v1530
      %v1532 = vrot.slane %v1527, %v1531
      %v1534 = vadd.f32 %v1523, %v1532
      %v1535 = vadd.f32 %v1524, %v1532
      %v1536 = vadd.f32 %v1525, %v1532
      %v1537 = vadd.f32 %v1526, %v1532
      %vm1538 = vcmp.ge.f32.partialorder %v1534, 0.0
      %vm1539 = vcmp.ge.f32.partialorder %v1535, 0.0
      %vm1540 = vcmp.ge.f32.partialorder %v1536, 0.0
      %vm1541 = vcmp.ge.f32.partialorder %v1537, 0.0
      %v1542 = vmul.f32 %v1534, 0.2
      %v1543 = vmul.f32 %v1535, 0.2
      %v1544 = vmul.f32 %v1536, 0.2
      %v1545 = vmul.f32 %v1537, 0.2
      %v1546 = vsel %vm1538, %v1534, %v1542
      %v1547 = vsel %vm1539, %v1535, %v1543
      %v1548 = vsel %vm1540, %v1536, %v1544
      %v1549 = vsel %vm1541, %v1537, %v1545
      %v1550 = vpack.c.bf16 %v1547, %v1546
      %v1551 = vpack.c.bf16 %v1549, %v1548
      %v1552 = vld [vmem:[%s5] sm:$0xf]
      %v1553 = vld [vmem:[%s5 + $0x4] sm:$0xf]
      %v1554 = vld [vmem:[%s5 + $0x8] sm:$0xf]
      %v1555 = vld [vmem:[%s5 + $0xc] sm:$0xf]
      %v1556 = vld [vmem:[%s5 + $0x10] sm:$0xf]
      %v1557 = vld [vmem:[%s5 + $0x14] sm:$0xf]
      %v1558 = vld [vmem:[%s5 + $0x18] sm:$0xf]
      %v1559 = vld [vmem:[%s5 + $0x1c] sm:$0xf]
      %v1560 = vld [vmem:[%s5 + $0x20] sm:$0xf]
      %v1561 = vld [vmem:[%s5 + $0x24] sm:$0xf]
      %v1562 = vld [vmem:[%s5 + $0x28] sm:$0xf]
      %v1563 = vld [vmem:[%s5 + $0x2c] sm:$0xf]
      %v1564 = vld [vmem:[%s5 + $0x30] sm:$0xf]
      %v1565 = vld [vmem:[%s5 + $0x34] sm:$0xf]
      %v1566 = vld [vmem:[%s5 + $0x38] sm:$0xf]
      %v1567 = vld [vmem:[%s5 + $0x3c] sm:$0xf]
      %v1584 = vunpack.c.l.b16 %v1552
      %v1585 = vunpack.c.l.b16 %v1553
      %v1586 = vunpack.c.l.b16 %v1554
      %v1587 = vunpack.c.l.b16 %v1555
      %v1588 = vunpack.c.l.b16 %v1556
      %v1589 = vunpack.c.l.b16 %v1557
      %v1590 = vunpack.c.l.b16 %v1558
      %v1591 = vunpack.c.l.b16 %v1559
      %v1592 = vunpack.c.l.b16 %v1560
      %v1593 = vunpack.c.l.b16 %v1561
      %v1594 = vunpack.c.l.b16 %v1562
      %v1595 = vunpack.c.l.b16 %v1563
      %v1596 = vunpack.c.l.b16 %v1564
      %v1597 = vunpack.c.l.b16 %v1565
      %v1598 = vunpack.c.l.b16 %v1566
      %v1599 = vunpack.c.l.b16 %v1567
      %v1600 = vpack.c.b16 %v1585, %v1584
      %v1601 = vpack.c.b16 %v1587, %v1586
      %v1602 = vpack.c.b16 %v1589, %v1588
      %v1603 = vpack.c.b16 %v1591, %v1590
      %v1604 = vpack.c.b16 %v1593, %v1592
      %v1605 = vpack.c.b16 %v1595, %v1594
      %v1606 = vpack.c.b16 %v1597, %v1596
      %v1607 = vpack.c.b16 %v1599, %v1598
      %1616 = vmatprep.subr.bf16.mxu0 0
      %1617 = vmatpush1.bf16.msra.mxu0 %v1600
      %1618 = vmatprep.subr.bf16.mxu0 0
      %1619 = vmatpush1.bf16.msra.mxu0 %v1601
      %1620 = vmatprep.subr.bf16.mxu0 0
      %1621 = vmatpush1.bf16.msra.mxu0 %v1602
      %1622 = vmatprep.subr.bf16.mxu0 0
      %1623 = vmatpush1.bf16.msra.mxu0 %v1603
      %1624 = vmatprep.subr.bf16.mxu0 0
      %1625 = vmatpush1.bf16.msra.mxu0 %v1604
      %1626 = vmatprep.subr.bf16.mxu0 0
      %1627 = vmatpush1.bf16.msra.mxu0 %v1605
      %1628 = vmatprep.subr.bf16.mxu0 0
      %1629 = vmatpush1.bf16.msra.mxu0 %v1606
      %1630 = vmatprep.subr.bf16.mxu0 0
      %1631 = vmatpush1.bf16.msra.mxu0 %v1607
      %1632 = vmatprep.subr.bf16.mxu0 0
      %1633 = vmatpush1.bf16.msra.mxu0 0
      %1634 = vmatprep.subr.bf16.mxu0 0
      %1635 = vmatpush1.bf16.msra.mxu0 0
      %1636 = vmatprep.subr.bf16.mxu0 0
      %1637 = vmatpush1.bf16.msra.mxu0 0
      %1638 = vmatprep.subr.bf16.mxu0 0
      %1639 = vmatpush1.bf16.msra.mxu0 0
      %1640 = vmatprep.subr.bf16.mxu0 0
      %1641 = vmatpush1.bf16.msra.mxu0 0
      %1642 = vmatprep.subr.bf16.mxu0 0
      %1643 = vmatpush1.bf16.msra.mxu0 0
      %1644 = vmatprep.subr.bf16.mxu0 0
      %1645 = vmatpush1.bf16.msra.mxu0 0
      %1646 = vmatprep.subr.bf16.mxu0 0
      %1647 = vmatpush1.bf16.msra.mxu0 0
      %1648 = vmatprep.mubr.bf16.mxu0 0
      %1649 = vmatmul.mubr.bf16.gmra.mrb[0].mxu0 %v1550
      %v1650 = vpop.f32.mrb[0].mxu0
      %v1651 = vadd.f32 0.0, %v1650
      %v1652 = vpop.f32.mrb[0].mxu0
      %v1653 = vpop.f32.mrb[0].mxu0
      %v1654 = vadd.f32 0.0, %v1653
      %v1655 = vpop.f32.mrb[0].mxu0
      %1656 = vmatprep.mubr.bf16.mxu0 0
      %1657 = vmatmul.mubr.bf16.gmra.mrb[0].mxu0 %v1551
      %v1658 = vpop.f32.mrb[0].mxu0
      %v1659 = vadd.f32 0.0, %v1658
      %v1660 = vpop.f32.mrb[0].mxu0
      %v1661 = vpop.f32.mrb[0].mxu0
      %v1662 = vadd.f32 0.0, %v1661
      %v1663 = vpop.f32.mrb[0].mxu0
      %1664 = vdwg.mxu0
      %s1665 = scalar_lea.vmem %s5, 64
      %v1666 = vld [vmem:[%s1665] sm:$0xf]
      %v1667 = vld [vmem:[%s1665 + $0x4] sm:$0xf]
      %v1668 = vld [vmem:[%s1665 + $0x8] sm:$0xf]
      %v1669 = vld [vmem:[%s1665 + $0xc] sm:$0xf]
      %v1670 = vld [vmem:[%s1665 + $0x10] sm:$0xf]
      %v1671 = vld [vmem:[%s1665 + $0x14] sm:$0xf]
      %v1672 = vld [vmem:[%s1665 + $0x18] sm:$0xf]
      %v1673 = vld [vmem:[%s1665 + $0x1c] sm:$0xf]
      %v1674 = vld [vmem:[%s1665 + $0x20] sm:$0xf]
      %v1675 = vld [vmem:[%s1665 + $0x24] sm:$0xf]
      %v1676 = vld [vmem:[%s1665 + $0x28] sm:$0xf]
      %v1677 = vld [vmem:[%s1665 + $0x2c] sm:$0xf]
      %v1678 = vld [vmem:[%s1665 + $0x30] sm:$0xf]
      %v1679 = vld [vmem:[%s1665 + $0x34] sm:$0xf]
      %v1680 = vld [vmem:[%s1665 + $0x38] sm:$0xf]
      %v1681 = vld [vmem:[%s1665 + $0x3c] sm:$0xf]
      %v1698 = vunpack.c.l.b16 %v1666
      %v1699 = vunpack.c.l.b16 %v1667
      %v1700 = vunpack.c.l.b16 %v1668
      %v1701 = vunpack.c.l.b16 %v1669
      %v1702 = vunpack.c.l.b16 %v1670
      %v1703 = vunpack.c.l.b16 %v1671
      %v1704 = vunpack.c.l.b16 %v1672
      %v1705 = vunpack.c.l.b16 %v1673
      %v1706 = vunpack.c.l.b16 %v1674
      %v1707 = vunpack.c.l.b16 %v1675
      %v1708 = vunpack.c.l.b16 %v1676
      %v1709 = vunpack.c.l.b16 %v1677
      %v1710 = vunpack.c.l.b16 %v1678
      %v1711 = vunpack.c.l.b16 %v1679
      %v1712 = vunpack.c.l.b16 %v1680
      %v1713 = vunpack.c.l.b16 %v1681
      %v1714 = vpack.c.b16 %v1699, %v1698
      %v1715 = vpack.c.b16 %v1701, %v1700
      %v1716 = vpack.c.b16 %v1703, %v1702
      %v1717 = vpack.c.b16 %v1705, %v1704
      %v1718 = vpack.c.b16 %v1707, %v1706
      %v1719 = vpack.c.b16 %v1709, %v1708
      %v1720 = vpack.c.b16 %v1711, %v1710
      %v1721 = vpack.c.b16 %v1713, %v1712
      %1730 = vmatprep.subr.bf16.mxu0 0
      %1731 = vmatpush1.bf16.msra.mxu0 %v1714
      %1732 = vmatprep.subr.bf16.mxu0 0
      %1733 = vmatpush1.bf16.msra.mxu0 %v1715
      %1734 = vmatprep.subr.bf16.mxu0 0
      %1735 = vmatpush1.bf16.msra.mxu0 %v1716
      %1736 = vmatprep.subr.bf16.mxu0 0
      %1737 = vmatpush1.bf16.msra.mxu0 %v1717
      %1738 = vmatprep.subr.bf16.mxu0 0
      %1739 = vmatpush1.bf16.msra.mxu0 %v1718
      %1740 = vmatprep.subr.bf16.mxu0 0
      %1741 = vmatpush1.bf16.msra.mxu0 %v1719
      %1742 = vmatprep.subr.bf16.mxu0 0
      %1743 = vmatpush1.bf16.msra.mxu0 %v1720
      %1744 = vmatprep.subr.bf16.mxu0 0
      %1745 = vmatpush1.bf16.msra.mxu0 %v1721
      %1746 = vmatprep.subr.bf16.mxu0 0
      %1747 = vmatpush1.bf16.msra.mxu0 0
      %1748 = vmatprep.subr.bf16.mxu0 0
      %1749 = vmatpush1.bf16.msra.mxu0 0
      %1750 = vmatprep.subr.bf16.mxu0 0
      %1751 = vmatpush1.bf16.msra.mxu0 0
      %1752 = vmatprep.subr.bf16.mxu0 0
      %1753 = vmatpush1.bf16.msra.mxu0 0
      %1754 = vmatprep.subr.bf16.mxu0 0
      %1755 = vmatpush1.bf16.msra.mxu0 0
      %1756 = vmatprep.subr.bf16.mxu0 0
      %1757 = vmatpush1.bf16.msra.mxu0 0
      %1758 = vmatprep.subr.bf16.mxu0 0
      %1759 = vmatpush1.bf16.msra.mxu0 0
      %1760 = vmatprep.subr.bf16.mxu0 0
      %1761 = vmatpush1.bf16.msra.mxu0 0
      %1762 = vmatprep.mubr.bf16.mxu0 0
      %1763 = vmatmul.mubr.bf16.gmra.mrb[0].mxu0 %v1550
      %v1764 = vpop.f32.mrb[0].mxu0
      %v1765 = vadd.f32 0.0, %v1764
      %v1766 = vpop.f32.mrb[0].mxu0
      %v1767 = vpop.f32.mrb[0].mxu0
      %v1768 = vadd.f32 0.0, %v1767
      %v1769 = vpop.f32.mrb[0].mxu0
      %1770 = vmatprep.mubr.bf16.mxu0 0
      %1771 = vmatmul.mubr.bf16.gmra.mrb[0].mxu0 %v1551
      %v1772 = vpop.f32.mrb[0].mxu0
      %v1773 = vadd.f32 0.0, %v1772
      %v1774 = vpop.f32.mrb[0].mxu0
      %v1775 = vpop.f32.mrb[0].mxu0
      %v1776 = vadd.f32 0.0, %v1775
      %v1777 = vpop.f32.mrb[0].mxu0
      %1778 = vdwg.mxu0
      %s1779 = scalar_lea.vmem %s5, 128
      %v1780 = vld [vmem:[%s1779] sm:$0xf]
      %v1781 = vld [vmem:[%s1779 + $0x4] sm:$0xf]
      %v1782 = vld [vmem:[%s1779 + $0x8] sm:$0xf]
      %v1783 = vld [vmem:[%s1779 + $0xc] sm:$0xf]
      %v1784 = vld [vmem:[%s1779 + $0x10] sm:$0xf]
      %v1785 = vld [vmem:[%s1779 + $0x14] sm:$0xf]
      %v1786 = vld [vmem:[%s1779 + $0x18] sm:$0xf]
      %v1787 = vld [vmem:[%s1779 + $0x1c] sm:$0xf]
      %v1788 = vld [vmem:[%s1779 + $0x20] sm:$0xf]
      %v1789 = vld [vmem:[%s1779 + $0x24] sm:$0xf]
      %v1790 = vld [vmem:[%s1779 + $0x28] sm:$0xf]
      %v1791 = vld [vmem:[%s1779 + $0x2c] sm:$0xf]
      %v1792 = vld [vmem:[%s1779 + $0x30] sm:$0xf]
      %v1793 = vld [vmem:[%s1779 + $0x34] sm:$0xf]
      %v1794 = vld [vmem:[%s1779 + $0x38] sm:$0xf]
      %v1795 = vld [vmem:[%s1779 + $0x3c] sm:$0xf]
      %v1812 = vunpack.c.l.b16 %v1780
      %v1813 = vunpack.c.l.b16 %v1781
      %v1814 = vunpack.c.l.b16 %v1782
      %v1815 = vunpack.c.l.b16 %v1783
      %v1816 = vunpack.c.l.b16 %v1784
      %v1817 = vunpack.c.l.b16 %v1785
      %v1818 = vunpack.c.l.b16 %v1786
      %v1819 = vunpack.c.l.b16 %v1787
      %v1820 = vunpack.c.l.b16 %v1788
      %v1821 = vunpack.c.l.b16 %v1789
      %v1822 = vunpack.c.l.b16 %v1790
      %v1823 = vunpack.c.l.b16 %v1791
      %v1824 = vunpack.c.l.b16 %v1792
      %v1825 = vunpack.c.l.b16 %v1793
      %v1826 = vunpack.c.l.b16 %v1794
      %v1827 = vunpack.c.l.b16 %v1795
      %v1828 = vpack.c.b16 %v1813, %v1812
      %v1829 = vpack.c.b16 %v1815, %v1814
      %v1830 = vpack.c.b16 %v1817, %v1816
      %v1831 = vpack.c.b16 %v1819, %v1818
      %v1832 = vpack.c.b16 %v1821, %v1820
      %v1833 = vpack.c.b16 %v1823, %v1822
      %v1834 = vpack.c.b16 %v1825, %v1824
      %v1835 = vpack.c.b16 %v1827, %v1826
      %1844 = vmatprep.subr.bf16.mxu0 0
      %1845 = vmatpush1.bf16.msra.mxu0 %v1828
      %1846 = vmatprep.subr.bf16.mxu0 0
      %1847 = vmatpush1.bf16.msra.mxu0 %v1829
      %1848 = vmatprep.subr.bf16.mxu0 0
      %1849 = vmatpush1.bf16.msra.mxu0 %v1830
      %1850 = vmatprep.subr.bf16.mxu0 0
      %1851 = vmatpush1.bf16.msra.mxu0 %v1831
      %1852 = vmatprep.subr.bf16.mxu0 0
      %1853 = vmatpush1.bf16.msra.mxu0 %v1832
      %1854 = vmatprep.subr.bf16.mxu0 0
      %1855 = vmatpush1.bf16.msra.mxu0 %v1833
      %1856 = vmatprep.subr.bf16.mxu0 0
      %1857 = vmatpush1.bf16.msra.mxu0 %v1834
      %1858 = vmatprep.subr.bf16.mxu0 0
      %1859 = vmatpush1.bf16.msra.mxu0 %v1835
      %1860 = vmatprep.subr.bf16.mxu0 0
      %1861 = vmatpush1.bf16.msra.mxu0 0
      %1862 = vmatprep.subr.bf16.mxu0 0
      %1863 = vmatpush1.bf16.msra.mxu0 0
      %1864 = vmatprep.subr.bf16.mxu0 0
      %1865 = vmatpush1.bf16.msra.mxu0 0
      %1866 = vmatprep.subr.bf16.mxu0 0
      %1867 = vmatpush1.bf16.msra.mxu0 0
      %1868 = vmatprep.subr.bf16.mxu0 0
      %1869 = vmatpush1.bf16.msra.mxu0 0
      %1870 = vmatprep.subr.bf16.mxu0 0
      %1871 = vmatpush1.bf16.msra.mxu0 0
      %1872 = vmatprep.subr.bf16.mxu0 0
      %1873 = vmatpush1.bf16.msra.mxu0 0
      %1874 = vmatprep.subr.bf16.mxu0 0
      %1875 = vmatpush1.bf16.msra.mxu0 0
      %1876 = vmatprep.mubr.bf16.mxu0 0
      %1877 = vmatmul.mubr.bf16.gmra.mrb[0].mxu0 %v1550
      %v1878 = vpop.f32.mrb[0].mxu0
      %v1879 = vadd.f32 0.0, %v1878
      %v1880 = vpop.f32.mrb[0].mxu0
      %v1881 = vpop.f32.mrb[0].mxu0
      %v1882 = vadd.f32 0.0, %v1881
      %v1883 = vpop.f32.mrb[0].mxu0
      %1884 = vmatprep.mubr.bf16.mxu0 0
      %1885 = vmatmul.mubr.bf16.gmra.mrb[0].mxu0 %v1551
      %v1886 = vpop.f32.mrb[0].mxu0
      %v1887 = vadd.f32 0.0, %v1886
      %v1888 = vpop.f32.mrb[0].mxu0
      %v1889 = vpop.f32.mrb[0].mxu0
      %v1890 = vadd.f32 0.0, %v1889
      %v1891 = vpop.f32.mrb[0].mxu0
      %1892 = vdwg.mxu0
      %v1893 = vrot.slane %v1651, 7
      %v1894 = vrot.slane %v1654, 7
      %v1895 = vrot.slane %v1659, 7
      %v1896 = vrot.slane %v1662, 7
      %v1897 = vsel %vm840, %v1895, %v1896
      %v1898 = vsel %vm840, %v1894, %v1895
      %v1899 = vsel %vm840, %v1893, %v1894
      %v1900 = vsel %vm840, %v1896, %v1893
      %v1901 = vsel %vm853, %v1900, 0.0
      %v1902 = vsel %vm854, %v1899, 0.0
      %v1903 = vsel %vm855, %v1898, 0.0
      %v1904 = vsel %vm856, %v1897, 0.0
      %v1905 = vrot.slane %v1879, 1
      %v1906 = vrot.slane %v1882, 1
      %v1907 = vrot.slane %v1887, 1
      %v1908 = vrot.slane %v1890, 1
      %v1909 = vsel %vm873, %v1907, %v1908
      %v1910 = vsel %vm873, %v1906, %v1907
      %v1911 = vsel %vm873, %v1905, %v1906
      %v1912 = vsel %vm873, %v1908, %v1905
      %v1913 = vsel %vm886, %v1911, 0.0
      %v1914 = vsel %vm887, %v1910, 0.0
      %v1915 = vsel %vm888, %v1909, 0.0
      %v1916 = vsel %vm889, %v1912, 0.0
      %v1917 = vadd.f32 %v1901, %v1765
      %v1918 = vadd.f32 %v1902, %v1768
      %v1919 = vadd.f32 %v1903, %v1773
      %v1920 = vadd.f32 %v1904, %v1776
      %v1921 = vadd.f32 %v1917, %v1913
      %v1922 = vadd.f32 %v1918, %v1914
      %v1923 = vadd.f32 %v1919, %v1915
      %v1924 = vadd.f32 %v1920, %v1916
      %v1925 = vld [vmem:[%s6] sm:$0x1]
      %v1927 = vlaneseq
      %v1928 = vshrl.u32 %v1927, 7
      %v1929 = vsub.s32 0, %v1928
      %v1930 = vrot.slane %v1925, %v1929
      %v1932 = vadd.f32 %v1921, %v1930
      %v1933 = vadd.f32 %v1922, %v1930
      %v1934 = vadd.f32 %v1923, %v1930
      %v1935 = vadd.f32 %v1924, %v1930
      %vm1936 = vcmask 15360
      %1937 = vst.msk [vmem:[%s285] sm:$0xff] %vm1936, %v1932
      %1938 = vst.msk [vmem:[%s285 + $0x8] sm:$0xff] %vm1936, %v1933
      %1939 = vst.msk [vmem:[%s285 + $0x10] sm:$0xff] %vm1936, %v1934
      %1940 = vst.msk [vmem:[%s285 + $0x18] sm:$0xff] %vm1936, %v1935
      %s1941 = smul.u32 2, %s18
      %p1942 = scmp.lt.s32.totalorder %s1941, 3
      %s1943 = scalar_select %p1942, %s1941, 3
      %s1944 = smul.addr %s1943, 2
      %s1945 = smul.addr %s1944, 8
      %s1946 = scalar_lea.vmem %s7, %s1945
      // Predicated region
      $region49: #{tweet_head_pallas.1} parent=47 // pred_check
        %p1947 = pneg %p188
      $region50: #{tweet_head_pallas.1} parent=47 // pred_check_branch
        %1949 = sbr.rel (%p1947) target = $region52
      $region51: #{tweet_head_pallas.1} parent=47 // pred_region
        %s1950 = smul.u32 2, %s18
      $region52: #{tweet_head_pallas.1} parent=47 // pred_fallthru
        _
    $region48: #{tweet_head_pallas.1} parent=5 // pred_fallthru
      _
    %p1951 = scmp.le.s32.totalorder 2, %s13
    // Predicated region
    $region53: #{tweet_head_pallas.1} parent=5 // pred_check
      %p1952 = pneg %p1951
    $region54: #{tweet_head_pallas.1} parent=5 // pred_check_branch
      %1954 = sbr.rel (%p1952) target = $region56
    $region55: #{tweet_head_pallas.1} parent=5 // pred_region
      %s1955 = ssub.s32 %s13, 2
      // Predicated region
      $region57: #{tweet_head_pallas.1} parent=55 // pred_check
        %p1956 = pneg %p194
      $region58: #{tweet_head_pallas.1} parent=55 // pred_check_branch
        %1958 = sbr.rel (%p1956) target = $region60
      $region59: #{tweet_head_pallas.1} parent=55 // pred_region
        %s1959 = smul.u32 2, %s19
        %p1960 = scmp.lt.s32.totalorder %s1959, 3
        %s1961 = scalar_select %p1960, %s1959, 3
        %s1962 = smul.addr %s1961, 2
        %s1963 = smul.addr %s1962, 8
        %s1964 = scalar_lea.vmem %s7, %s1963
      $region60: #{tweet_head_pallas.1} parent=55 // pred_fallthru
        _
    $region56: #{tweet_head_pallas.1} parent=5 // pred_fallthru
      _
  $region6: #{tweet_head_pallas.1} parent=0 // loop_footer
    %s17 = sadd.s32 1, %s13
  $region7: #{tweet_head_pallas.1} parent=0 // loop_footer_branch
    %12 = sbr.rel target = $region3
  $region8: #{tweet_head_pallas.1} parent=0 // loop_exit
    _

</llo_original>
